<compile_context>
chip_gen: v5e
topology: v5e:2x2
jax: 0.10.0
libtpu: 0.0.40
codegen_flags: <defaults>
</compile_context>

<pallas_src>
import numpy as np
import jax
import jax.numpy as jnp
from jax.experimental import pallas as pl
from jax.experimental.pallas import tpu as pltpu


# ------------------------------ sizing helpers ------------------------------ #

def _vmem_limit_bytes():
    """Scoped-VMEM limit derived from the actual chip (v7x: 64 MiB physical,
    v5e/v6e: 128 MiB).  Conservative v7x-safe default if the query fails."""
    try:
        cap = int(pltpu.get_tpu_info().vmem_capacity_bytes)
    except Exception:
        cap = 64 * 1024 * 1024
    return min((cap * 3) // 4, 100 * 1024 * 1024)


def _sublane_quantum(itemsize):
    # f32 -> 8 sublanes per vreg row, bf16 -> 16, int8/fp8 -> 32.
    return max(8, 32 // max(itemsize, 1))


def _round_up(x, m):
    return -(-x // m) * m


def _pick_pack_factor(n_ch, HW, itemsize):
    """If n_ch is below the dtype's sublane quantum, fold a factor r of HW into
    the channel axis (free row-major reshape) so every vreg / DMA row is dense."""
    q = _sublane_quantum(itemsize)
    if n_ch >= q or HW <= 1:
        return 1
    r_target = -(-q // n_ch)
    for r in range(r_target, min(HW, 4 * r_target) + 1):
        if HW % r == 0:
            return r
    return 1


def _pick_hw_tile(HW, n_task, n_ch_rows, itemsize, budget, max_hw_tile=None):
    """Largest lane-aligned HW tile whose double-buffered in+out working set
    fits `budget`.  Prefers tiles that divide HW exactly (>=512 lanes);
    otherwise returns a big tile and lets the pool kernel mask the ragged tail."""
    per_lane = 2 * (n_task + 1) * n_ch_rows * itemsize
    max_tile = max(256, min(8192, budget // max(per_lane, 1)))
    max_tile = (max_tile // 128) * 128
    if max_hw_tile is not None:
        max_tile = max(128, min(max_tile, (max_hw_tile // 128) * 128))
    if HW <= max_tile:
        return HW                                  # single full-extent tile
    best_div = 0
    for t in range(128, max_tile + 1, 128):
        if HW % t == 0:
            best_div = t
    if best_div >= 512:
        return best_div                            # exact tiling, no masking
    return max_tile                                # ragged; kernel masks tail


def _pick_outer_split(nb, n_tiles):
    """Extra 'parallel' grid extent for pass 1 so nb==1 still spans >= 2 cores
    (v7x megacore).  Divisor-only so every HW tile index stays in range."""
    if nb >= 2 or n_tiles < 2:
        return 1
    for cand in (2, 3, 4, 5):
        if n_tiles % cand == 0:
            return cand
    return 1


# ------------------------------- Pallas kernels ----------------------------- #

def _make_pool_kernel(n_task, hw_tile, hw_total, ragged, chunk):
    """Pass 1: per-task global sums over HW.

    Grid (nb, hw_outer, hw_inner).  NOTE: the reduction axis (hw_inner) must
    stay LAST and 'arbitrary' — the (1, 1, n_ch, n_task) output block and the
    VMEM scratch are resident across it.  Per step we only do lane-aligned VPU
    adds into a (n_task, n_ch, chunk) scratch; the single cross-lane reduce and
    the narrow (n_ch, 1) stores run once, on the last step.  Ragged tails are
    masked with a lane iota (reads of DMA padding are undefined)."""
    n_chunks = hw_tile // chunk

    def kernel(*refs):
        x_refs = refs[:n_task]                 # each (1, n_ch, hw_tile)
        o_ref = refs[n_task]                   # (1, 1, n_ch, n_task) f32
        acc_ref = refs[n_task + 1]             # (n_task, n_ch, chunk) f32

        i = pl.program_id(2)

        @pl.when(i == 0)
        def _():
            acc_ref[...] = jnp.zeros_like(acc_ref)

        if ragged:
            tile_idx = pl.program_id(1) * pl.num_programs(2) + i
            start = tile_idx * hw_tile
            lane = jax.lax.broadcasted_iota(jnp.int32, (1, hw_tile), 1)
            valid = (start + lane) < hw_total

        for t in range(n_task):
            x = x_refs[t][0].astype(jnp.float32)           # (n_ch, hw_tile)
            if ragged:
                x = jnp.where(valid, x, 0.0)
            part = acc_ref[t]
            for k in range(n_chunks):                      # lane-aligned adds
                part = part + x[:, k * chunk:(k + 1) * chunk]
            acc_ref[t] = part

        @pl.when(i == pl.num_programs(2) - 1)
        def _():
            for t in range(n_task):
                o_ref[0, 0, :, t:t + 1] = jnp.sum(
                    acc_ref[t], axis=-1, keepdims=True)

    return kernel


def _weighted_sum_kernel(attn_ref, *refs):
    """Pass 2, grid (nb, n_hw): out[c, s] = sum_t attn[c, t] * x_t[c, s].
    HW on the 128-lane axis -> dense, unmasked stores; f32 accumulate; the
    per-channel attention column broadcasts across lanes (HBM-bound)."""
    o_ref = refs[-1]            # (1, n_ch, hw_tile)
    x_refs = refs[:-1]          # n_task refs, each (1, n_ch, hw_tile)

    acc = attn_ref[0, :, 0:1] * x_refs[0][0].astype(jnp.float32)
    for t in range(1, len(x_refs)):
        acc = acc + attn_ref[0, :, t:t + 1] * x_refs[t][0].astype(jnp.float32)
    o_ref[0] = acc.astype(o_ref.dtype)


def _make_fused_kernel(n_task, n_ch, HW, n_mid):
    """Fused single-pass kernel (grid=(nb,)): pool -> folded 1x1-conv MLP ->
    task softmax -> attention-weighted sum, with x kept VMEM-resident so each
    task tensor is read from HBM exactly once.

    The MLP runs in 'column' form: activations are (C, 128)-replicated columns
    with channels on sublanes, and the first/last layers are supplied as
    per-task weight blocks, so no in-kernel transpose / reshape is needed.
    HW is processed in lane chunks to bound intermediate VMEM/vreg pressure."""
    REP = 128                              # replicate columns across one vreg row
    chunk = HW if HW < 512 else 512
    n_full = HW // chunk
    rem = HW - n_full * chunk
    inv_hw = 1.0 / float(HW)

    def kernel(*refs):
        pos = 0
        xs = refs[pos:pos + n_task]; pos += n_task         # (1, n_ch, HW)
        W1s = refs[pos:pos + n_task]; pos += n_task        # (C, n_ch)
        b1 = refs[pos]; pos += 1                           # (C, 1)
        mids = []
        for _ in range(n_mid):
            mids.append((refs[pos], refs[pos + 1])); pos += 2
        Wls = refs[pos:pos + n_task]; pos += n_task        # (n_ch, C)
        bls = refs[pos:pos + n_task]; pos += n_task        # (n_ch, 1)
        o_ref = refs[pos]                                  # (1, n_ch, HW)

        def chunk_slice(ref, off, size):
            return ref[0, :, pl.ds(off, size)].astype(jnp.float32)

        # ---- global average pool (f32 accumulate), per task ----
        def pool_body(i, acc):
            off = i * chunk
            if chunk % 128 == 0:
                off = pl.multiple_of(off, chunk)
            return tuple(
                acc[t] + jnp.sum(chunk_slice(xs[t], off, chunk),
                                 axis=-1, keepdims=True)
                for t in range(n_task))

        sums = tuple(jnp.zeros((n_ch, 1), jnp.float32) for _ in range(n_task))
        if n_full > 0:
            sums = jax.lax.fori_loop(0, n_full, pool_body, sums)
        if rem > 0:
            sums = tuple(
                sums[t] + jnp.sum(chunk_slice(xs[t], n_full * chunk, rem),
                                  axis=-1, keepdims=True)
                for t in range(n_task))

        # ---- folded 1x1-conv MLP (column form; BN folded, ReLU in between) --
        # NOTE: in-kernel f32 matmuls may run at the TPU-default (bf16-pass)
        # matmul precision; the MLP is tiny so the error is far below the
        # attention/output scale.
        C = W1s[0].shape[0]
        h = jnp.broadcast_to(b1[...], (C, REP))
        for t in range(n_task):
            h = h + jnp.dot(W1s[t][...],
                            jnp.broadcast_to(sums[t] * inv_hw, (n_ch, REP)),
                            preferred_element_type=jnp.float32)
        h = jnp.maximum(h, 0.0)
        for Wr, br in mids:
            h = jnp.dot(Wr[...], h, preferred_element_type=jnp.float32)
            h = jnp.maximum(h + br[...], 0.0)
        logits = [jnp.dot(Wls[t][...], h, preferred_element_type=jnp.float32)
                  + bls[t][...] for t in range(n_task)]

        # ---- softmax over tasks: purely elementwise on (n_ch, REP) ----
        m = logits[0]
        for t in range(1, n_task):
            m = jnp.maximum(m, logits[t])
        exps = [jnp.exp(l - m) for l in logits]
        denom = exps[0]
        for t in range(1, n_task):
            denom = denom + exps[t]
        attn = [(e / denom)[:, 0:1] for e in exps]          # (n_ch, 1) each

        # ---- attention-weighted sum, streamed over lane chunks ----
        def weighted(off, size):
            acc = attn[0] * chunk_slice(xs[0], off, size)
            for t in range(1, n_task):
                acc = acc + attn[t] * chunk_slice(xs[t], off, size)
            return acc.astype(o_ref.dtype)

        def ws_body(i, carry):
            off = i * chunk
            if chunk % 128 == 0:
                off = pl.multiple_of(off, chunk)
            o_ref[0, :, pl.ds(off, chunk)] = weighted(off, chunk)
            return carry

        if n_full > 0:
            jax.lax.fori_loop(0, n_full, ws_body, 0)
        if rem > 0:
            off = n_full * chunk
            o_ref[0, :, pl.ds(off, rem)] = weighted(off, rem)

    return kernel


# ---------------------------------- wrapper --------------------------------- #

def _fold_bn(pt_params, eps=1e-5):
    """Fold eval-mode BatchNorm into the 1x1-conv weight/bias."""
    folded = []
    for Wm, b, bn in pt_params:
        Wm = jnp.asarray(Wm, jnp.float32)
        b = jnp.asarray(b, jnp.float32)
        if bn is not None:
            gamma, beta, mean, var = (jnp.asarray(a, jnp.float32) for a in bn)
            s = gamma / jnp.sqrt(var + eps)
            Wm = Wm * s[:, None]
            b = s * (b - mean) + beta
        folded.append((Wm, b))
    return folded


def _tam_fused(xs, folded, n_task, n_ch, HW, H, W, dtype, vmem_limit):
    nb = xs[0].shape[0]
    (W1, b1) = folded[0]
    (Wl, bl) = folded[-1]
    mids = folded[1:-1]

    # Per-task first/last layer blocks (wrapper-side, free) so the kernel's
    # column-form MLP never needs a transpose or a lane<->sublane reshape.
    w_arrays = [W1[:, t::n_task] for t in range(n_task)]            # (C, n_ch)
    w_arrays.append(b1.reshape(-1, 1))                              # (C, 1)
    for Wm, bm in mids:
        w_arrays.append(Wm)                                         # (out, in)
        w_arrays.append(bm.reshape(-1, 1))
    w_arrays += [Wl[t::n_task, :] for t in range(n_task)]           # (n_ch, C)
    w_arrays += [bl[t::n_task].reshape(-1, 1) for t in range(n_task)]

    kernel = _make_fused_kernel(n_task, n_ch, HW, len(mids))

    out = pl.pallas_call(
        kernel,
        out_shape=jax.ShapeDtypeStruct((nb, n_ch, HW), dtype),
        grid=(nb,),
        in_specs=([pl.BlockSpec((1, n_ch, HW), lambda b: (b, 0, 0))
                   for _ in range(n_task)] +
                  [pl.BlockSpec(a.shape, lambda b: (0, 0)) for a in w_arrays]),
        out_specs=pl.BlockSpec((1, n_ch, HW), lambda b: (b, 0, 0)),
        compiler_params=pltpu.CompilerParams(
            dimension_semantics=("parallel",),
            vmem_limit_bytes=vmem_limit),
    )(*xs, *w_arrays)
    return out.reshape(nb, n_ch, H, W)


def _tam_two_pass(xs_p, folded, n_task, n_ch, r, HW, H, W, dtype,
                  vmem_limit, max_hw_tile):
    nb, n_ch_p, HW_p = xs_p[0].shape
    itemsize = jnp.dtype(dtype).itemsize
    n_ch_rows = _round_up(n_ch_p, _sublane_quantum(itemsize))
    budget = (vmem_limit * 3) // 5
    hw_tile = _pick_hw_tile(HW_p, n_task, n_ch_rows, itemsize, budget,
                            max_hw_tile)
    n_tiles = pl.cdiv(HW_p, hw_tile)
    ragged = (HW_p % hw_tile) != 0
    n_outer = _pick_outer_split(nb, n_tiles)
    n_inner = n_tiles // n_outer
    chunk = 128 if hw_tile % 128 == 0 else hw_tile

    # ---- pass 1: Pallas global sums (scaled to means afterwards) ----
    pooled_sum = pl.pallas_call(
        _make_pool_kernel(n_task, hw_tile, HW_p, ragged, chunk),
        out_shape=jax.ShapeDtypeStruct((nb, n_outer, n_ch_p, n_task),
                                       jnp.float32),
        grid=(nb, n_outer, n_inner),
        in_specs=[pl.BlockSpec((1, n_ch_p, hw_tile),
                               lambda b, o, i: (b, 0, o * n_inner + i))
                  for _ in range(n_task)],
        out_specs=pl.BlockSpec((1, 1, n_ch_p, n_task),
                               lambda b, o, i: (b, o, 0, 0)),
        scratch_shapes=[pltpu.VMEM((n_task, n_ch_p, chunk), jnp.float32)],
        compiler_params=pltpu.CompilerParams(
            dimension_semantics=("parallel", "parallel", "arbitrary"),
            vmem_limit_bytes=vmem_limit),
    )(*xs_p)

    pooled = jnp.sum(pooled_sum, axis=1)                 # (nb, n_ch_p, n_task)
    if r > 1:                                            # undo sublane packing
        pooled = pooled.reshape(nb, n_ch, r, n_task).sum(axis=2)
    pooled = pooled * (1.0 / HW)                         # (nb, n_ch, n_task)

    # ---- tiny MLP + task softmax on (nb, C): plain JAX (negligible work,
    #      kept out of the memory-bound kernels).  Channel order c*n_task + t
    #      matches PyTorch's stack(..., -1).reshape exactly. ----
    h = pooled.reshape(nb, n_ch * n_task)
    n_layers = len(folded)
    for li, (Wm, b) in enumerate(folded):
        h = jnp.dot(h, Wm.T, precision=jax.lax.Precision.HIGHEST) + b
        if li < n_layers - 1:
            h = jnp.maximum(h, 0.0)
    attn = jax.nn.softmax(h.reshape(nb, n_ch, n_task), axis=-1)      # f32
    attn_p = jnp.repeat(attn, r, axis=1) if r > 1 else attn          # packed

    # ---- pass 2: Pallas streaming attention-weighted sum ----
    out = pl.pallas_call(
        _weighted_sum_kernel,
        out_shape=jax.ShapeDtypeStruct((nb, n_ch_p, HW_p), dtype),
        grid=(nb, n_tiles),
        in_specs=([pl.BlockSpec((1, n_ch_p, n_task), lambda b, hh: (b, 0, 0))] +
                  [pl.BlockSpec((1, n_ch_p, hw_tile), lambda b, hh: (b, 0, hh))
                   for _ in range(n_task)]),
        out_specs=pl.BlockSpec((1, n_ch_p, hw_tile), lambda b, hh: (b, 0, hh)),
        compiler_params=pltpu.CompilerParams(
            dimension_semantics=("parallel", "parallel"),
            vmem_limit_bytes=vmem_limit),
    )(attn_p, *xs_p)

    return out.reshape(nb, n_ch, H, W)


def tam_pallas(t_xs, pt_params, eps=1e-5, *, max_hw_tile=None,
               force_two_pass=False):
    n_task = len(t_xs)
    nb, n_ch, H, W = t_xs[0].shape
    HW = H * W
    dtype = t_xs[0].dtype
    itemsize = jnp.dtype(dtype).itemsize

    vmem_limit = _vmem_limit_bytes()
    folded = _fold_bn(pt_params, eps)

    # NCHW-natural view (channels on sublanes, spatial on lanes) + sublane
    # packing when n_ch is below the dtype's sublane quantum.
    r = _pick_pack_factor(n_ch, HW, itemsize)
    n_ch_p, HW_p = n_ch * r, HW // r
    xs_p = [tx.reshape(nb, n_ch_p, HW_p) for tx in t_xs]

    # Fused single-pass path when inputs + output (double-buffered) + folded
    # weights fit comfortably in VMEM.  nb == 1 stays on the two-pass path so
    # the HW split can still feed both v7x TensorCores.
    C = n_ch * n_task
    w_bytes = sum(Wm.size * 4 + b.size * 4 for Wm, b in folded)
    fused_bytes = 2 * ((n_task + 1) * n_ch * HW * itemsize + w_bytes) + (4 << 20)
    use_fused = (not force_two_pass and r == 1 and n_ch >= 8 and nb >= 2
                 and len(folded) >= 2
                 and folded[0][0].shape == (C, C)
                 and folded[-1][0].shape[0] == C
                 and fused_bytes <= (vmem_limit * 7) // 10)
    if use_fused:
        return _tam_fused(xs_p, folded, n_task, n_ch, HW, H, W, dtype,
                          vmem_limit)
    return _tam_two_pass(xs_p, folded, n_task, n_ch, r, HW, H, W, dtype,
                         vmem_limit, max_hw_tile)


# -------------------------- parameters (deterministic) ---------------------- #

def make_pt_params(key, n_task, n_ch):
    """PyTorch-convention params: conv weight (out,in), bias (out,), BN stats."""
    C = n_task * n_ch
    dims = [(C, C, True), (C, n_ch, True), (n_ch, n_ch, True),
            (n_ch, n_ch, True), (n_ch, C, True), (C, C, False)]
    params = []
    for (c_in, c_out, has_bn) in dims:
        key, k1, k2, k3, k4, k5, k6 = jax.random.split(key, 7)
        Wm = jax.random.normal(k1, (c_out, c_in), jnp.float32) * 0.2
        b = jax.random.normal(k2, (c_out,), jnp.float32) * 0.1
        if has_bn:
            gamma = jax.random.uniform(k3, (c_out,), jnp.float32, 0.5, 1.5)
            beta = jax.random.normal(k4, (c_out,), jnp.float32) * 0.1
            mean = jax.random.normal(k5, (c_out,), jnp.float32) * 0.1
            var = jax.random.uniform(k6, (c_out,), jnp.float32, 0.5, 1.5)
            bn = (gamma, beta, mean, var)
        else:
            bn = None
        params.append((Wm, b, bn))
    return params


# ----------------------------- pure-JAX reference --------------------------- #

def tam_reference(t_xs, pt_params, n_task, eps=1e-5):
    nb, nc = t_xs[0].shape[:2]
    pooled = jnp.stack([jnp.mean(tx, axis=(2, 3)) for tx in t_xs], axis=-1)
    h = pooled.reshape(nb, nc * n_task)                  # order c*n_task + t
    n = len(pt_params)
    for i, (Wm, b, bn) in enumerate(pt_params):
        h = jnp.dot(h, Wm.T, precision=jax.lax.Precision.HIGHEST) + b
        if bn is not None:
            gamma, beta, mean, var = bn
            h = (h - mean) / jnp.sqrt(var + eps) * gamma + beta
        if i < n - 1:
            h = jnp.maximum(h, 0.0)
    attn = jax.nn.softmax(h.reshape(nb, nc, n_task), axis=-1)
    return sum(attn[:, :, t][:, :, None, None] * t_xs[t] for t in range(n_task))


# ------------------------------------ main ---------------------------------- #

if __name__ == "__main__":
    key = jax.random.PRNGKey(0)

    # --- config A: fused single-pass path (+ forced two-pass cross-check) ---
    n_task, n_ch, nb, H, W = 2, 8, 2, 16, 16
    key, *xkeys = jax.random.split(key, n_task + 1)
    t_xs = [jax.random.normal(k, (nb, n_ch, H, W), jnp.float32) for k in xkeys]
    pt_params = make_pt_params(jax.random.PRNGKey(42), n_task, n_ch)
    ref = tam_reference(t_xs, pt_params, n_task)

    out_fused = jax.block_until_ready(tam_pallas(t_xs, pt_params))
    out_2pass = jax.block_until_ready(
        tam_pallas(t_xs, pt_params, force_two_pass=True))
    assert out_fused.shape == out_2pass.shape == ref.shape == (nb, n_ch, H, W)
    np.testing.assert_allclose(np.asarray(out_2pass), np.asarray(ref),
                               rtol=1e-4, atol=1e-4)
    # Fused path: in-kernel MXU f32 matmuls may use TPU-default (bf16-pass)
    # precision for the tiny MLP -> compare with a correspondingly looser tol.
    np.testing.assert_allclose(np.asarray(out_fused), np.asarray(ref),
                               rtol=5e-2, atol=5e-2)

    # --- config B: two-pass, ragged HW tiling + hw_outer parallel split -----
    n_task, n_ch, nb, H, W = 3, 8, 1, 18, 18
    key, *xkeys = jax.random.split(key, n_task + 1)
    t_xs = [jax.random.normal(k, (nb, n_ch, H, W), jnp.float32) for k in xkeys]
    pt_params = make_pt_params(jax.random.PRNGKey(7), n_task, n_ch)
    out = jax.block_until_ready(tam_pallas(t_xs, pt_params, max_hw_tile=128))
    np.testing.assert_allclose(
        np.asarray(out), np.asarray(tam_reference(t_xs, pt_params, n_task)),
        rtol=1e-4, atol=1e-4)

    # --- config C: two-pass with sublane packing (n_ch < f32 quantum) -------
    n_task, n_ch, nb, H, W = 2, 4, 2, 16, 16
    key, *xkeys = jax.random.split(key, n_task + 1)
    t_xs = [jax.random.normal(k, (nb, n_ch, H, W), jnp.float32) for k in xkeys]
    pt_params = make_pt_params(jax.random.PRNGKey(11), n_task, n_ch)
    out = jax.block_until_ready(tam_pallas(t_xs, pt_params))
    np.testing.assert_allclose(
        np.asarray(out), np.asarray(tam_reference(t_xs, pt_params, n_task)),
        rtol=1e-4, atol=1e-4)

    print("KERNEL_OK")
</pallas_src>

<mosaic_0001>
module attributes {stable_mosaic.version = 11 : i64} {
  func.func @kernel(%arg0: i32, %arg1: memref<1x8x256xf32, #tpu.memory_space<vmem>>, %arg2: memref<1x8x256xf32, #tpu.memory_space<vmem>>, %arg3: memref<16x8xf32, #tpu.memory_space<vmem>>, %arg4: memref<16x8xf32, #tpu.memory_space<vmem>>, %arg5: memref<16x1xf32, #tpu.memory_space<vmem>>, %arg6: memref<8x16xf32, #tpu.memory_space<vmem>>, %arg7: memref<8x1xf32, #tpu.memory_space<vmem>>, %arg8: memref<8x8xf32, #tpu.memory_space<vmem>>, %arg9: memref<8x1xf32, #tpu.memory_space<vmem>>, %arg10: memref<8x8xf32, #tpu.memory_space<vmem>>, %arg11: memref<8x1xf32, #tpu.memory_space<vmem>>, %arg12: memref<16x8xf32, #tpu.memory_space<vmem>>, %arg13: memref<16x1xf32, #tpu.memory_space<vmem>>, %arg14: memref<8x16xf32, #tpu.memory_space<vmem>>, %arg15: memref<8x16xf32, #tpu.memory_space<vmem>>, %arg16: memref<8x1xf32, #tpu.memory_space<vmem>>, %arg17: memref<8x1xf32, #tpu.memory_space<vmem>>, %arg18: memref<1x8x256xf32, #tpu.memory_space<vmem>>) attributes {dimension_semantics = [#tpu.dimension_semantics<parallel>], iteration_bounds = array<i64: 2>, scalar_prefetch = 0 : i64, scratch_operands = 0 : i64, tpu.core_type = #tpu.core_type<tc>, window_params = [{transform_indices = @transform_0, window_bounds = array<i64: 1, 8, 256>}, {transform_indices = @transform_1, window_bounds = array<i64: 1, 8, 256>}, {pipeline_mode = #tpu.pipeline_mode<synchronous>, transform_indices = @transform_2, window_bounds = array<i64: 16, 8>}, {pipeline_mode = #tpu.pipeline_mode<synchronous>, transform_indices = @transform_3, window_bounds = array<i64: 16, 8>}, {pipeline_mode = #tpu.pipeline_mode<synchronous>, transform_indices = @transform_4, window_bounds = array<i64: 16, 1>}, {pipeline_mode = #tpu.pipeline_mode<synchronous>, transform_indices = @transform_5, window_bounds = array<i64: 8, 16>}, {pipeline_mode = #tpu.pipeline_mode<synchronous>, transform_indices = @transform_6, window_bounds = array<i64: 8, 1>}, {pipeline_mode = #tpu.pipeline_mode<synchronous>, transform_indices = @transform_7, window_bounds = array<i64: 8, 8>}, {pipeline_mode = #tpu.pipeline_mode<synchronous>, transform_indices = @transform_8, window_bounds = array<i64: 8, 1>}, {pipeline_mode = #tpu.pipeline_mode<synchronous>, transform_indices = @transform_9, window_bounds = array<i64: 8, 8>}, {pipeline_mode = #tpu.pipeline_mode<synchronous>, transform_indices = @transform_10, window_bounds = array<i64: 8, 1>}, {pipeline_mode = #tpu.pipeline_mode<synchronous>, transform_indices = @transform_11, window_bounds = array<i64: 16, 8>}, {pipeline_mode = #tpu.pipeline_mode<synchronous>, transform_indices = @transform_12, window_bounds = array<i64: 16, 1>}, {pipeline_mode = #tpu.pipeline_mode<synchronous>, transform_indices = @transform_13, window_bounds = array<i64: 8, 16>}, {pipeline_mode = #tpu.pipeline_mode<synchronous>, transform_indices = @transform_14, window_bounds = array<i64: 8, 16>}, {pipeline_mode = #tpu.pipeline_mode<synchronous>, transform_indices = @transform_15, window_bounds = array<i64: 8, 1>}, {pipeline_mode = #tpu.pipeline_mode<synchronous>, transform_indices = @transform_16, window_bounds = array<i64: 8, 1>}, {transform_indices = @transform_17, window_bounds = array<i64: 1, 8, 256>}]} {
    %cst = arith.constant 0.000000e+00 : f32
    %0 = vector.broadcast %cst : f32 to vector<8x1xf32>
    %cst_0 = arith.constant 0.000000e+00 : f32
    %1 = vector.broadcast %cst_0 : f32 to vector<8x1xf32>
    %c0_i32 = arith.constant 0 : i32
    %c256_i32 = arith.constant 256 : i32
    %2 = arith.muli %c0_i32, %c256_i32 : i32
    %3 = tpu.assume_multiple %2, 256 : i32
    %c0 = arith.constant 0 : index
    %c0_1 = arith.constant 0 : index
    %4 = arith.index_cast %3 : i32 to index
    %5 = vector.load %arg1[%c0, %c0_1, %4] : memref<1x8x256xf32, #tpu.memory_space<vmem>>, vector<1x8x256xf32>
    %6 = vector.shape_cast %5 : vector<1x8x256xf32> to vector<8x256xf32>
    %cst_2 = arith.constant dense<0.000000e+00> : vector<8xf32>
    %7 = vector.multi_reduction <add>, %6, %cst_2 [1] : vector<8x256xf32> to vector<8xf32>
    %8 = vector.shape_cast %7 : vector<8xf32> to vector<8x1xf32>
    %9 = arith.addf %0, %8 : vector<8x1xf32>
    %c0_3 = arith.constant 0 : index
    %c0_4 = arith.constant 0 : index
    %10 = arith.index_cast %3 : i32 to index
    %11 = vector.load %arg2[%c0_3, %c0_4, %10] : memref<1x8x256xf32, #tpu.memory_space<vmem>>, vector<1x8x256xf32>
    %12 = vector.shape_cast %11 : vector<1x8x256xf32> to vector<8x256xf32>
    %cst_5 = arith.constant dense<0.000000e+00> : vector<8xf32>
    %13 = vector.multi_reduction <add>, %12, %cst_5 [1] : vector<8x256xf32> to vector<8xf32>
    %14 = vector.shape_cast %13 : vector<8xf32> to vector<8x1xf32>
    %15 = arith.addf %1, %14 : vector<8x1xf32>
    %c1_i32 = arith.constant 1 : i32
    %c0_6 = arith.constant 0 : index
    %c0_7 = arith.constant 0 : index
    %16 = vector.load %arg5[%c0_6, %c0_7] : memref<16x1xf32, #tpu.memory_space<vmem>>, vector<16x1xf32>
    %17 = vector.shape_cast %16 : vector<16x1xf32> to vector<16x1xf32>
    %18 = vector.broadcast %17 : vector<16x1xf32> to vector<16x128xf32>
    %c0_8 = arith.constant 0 : index
    %c0_9 = arith.constant 0 : index
    %19 = vector.load %arg3[%c0_8, %c0_9] : memref<16x8xf32, #tpu.memory_space<vmem>>, vector<16x8xf32>
    %cst_10 = arith.constant 3.906250e-03 : f32
    %20 = vector.broadcast %cst_10 : f32 to vector<8x1xf32>
    %21 = arith.mulf %9, %20 : vector<8x1xf32>
    %22 = vector.shape_cast %21 : vector<8x1xf32> to vector<8x1xf32>
    %23 = vector.broadcast %22 : vector<8x1xf32> to vector<8x128xf32>
    %cst_11 = arith.constant dense<0.000000e+00> : vector<16x128xf32>
    %24 = tpu.matmul %19, %23, %cst_11 {dimension_numbers = #tpu.dot_dimension_numbers<[1], [0], [0], [1], [0, 0, 1, 1], [], []>} : vector<16x8xf32>, vector<8x128xf32>, vector<16x128xf32> -> vector<16x128xf32>
    %25 = arith.addf %18, %24 : vector<16x128xf32>
    %c0_12 = arith.constant 0 : index
    %c0_13 = arith.constant 0 : index
    %26 = vector.load %arg4[%c0_12, %c0_13] : memref<16x8xf32, #tpu.memory_space<vmem>>, vector<16x8xf32>
    %cst_14 = arith.constant 3.906250e-03 : f32
    %27 = vector.broadcast %cst_14 : f32 to vector<8x1xf32>
    %28 = arith.mulf %15, %27 : vector<8x1xf32>
    %29 = vector.shape_cast %28 : vector<8x1xf32> to vector<8x1xf32>
    %30 = vector.broadcast %29 : vector<8x1xf32> to vector<8x128xf32>
    %cst_15 = arith.constant dense<0.000000e+00> : vector<16x128xf32>
    %31 = tpu.matmul %26, %30, %cst_15 {dimension_numbers = #tpu.dot_dimension_numbers<[1], [0], [0], [1], [0, 0, 1, 1], [], []>} : vector<16x8xf32>, vector<8x128xf32>, vector<16x128xf32> -> vector<16x128xf32>
    %32 = arith.addf %25, %31 : vector<16x128xf32>
    %cst_16 = arith.constant 0.000000e+00 : f32
    %33 = vector.broadcast %cst_16 : f32 to vector<16x128xf32>
    %34 = arith.maximumf %32, %33 : vector<16x128xf32>
    %c0_17 = arith.constant 0 : index
    %c0_18 = arith.constant 0 : index
    %35 = vector.load %arg6[%c0_17, %c0_18] : memref<8x16xf32, #tpu.memory_space<vmem>>, vector<8x16xf32>
    %cst_19 = arith.constant dense<0.000000e+00> : vector<8x128xf32>
    %36 = tpu.matmul %35, %34, %cst_19 {dimension_numbers = #tpu.dot_dimension_numbers<[1], [0], [0], [1], [0, 0, 1, 1], [], []>} : vector<8x16xf32>, vector<16x128xf32>, vector<8x128xf32> -> vector<8x128xf32>
    %c0_20 = arith.constant 0 : index
    %c0_21 = arith.constant 0 : index
    %37 = vector.load %arg7[%c0_20, %c0_21] : memref<8x1xf32, #tpu.memory_space<vmem>>, vector<8x1xf32>
    %38 = vector.broadcast %37 : vector<8x1xf32> to vector<8x128xf32>
    %39 = arith.addf %36, %38 : vector<8x128xf32>
    %cst_22 = arith.constant 0.000000e+00 : f32
    %40 = vector.broadcast %cst_22 : f32 to vector<8x128xf32>
    %41 = arith.maximumf %39, %40 : vector<8x128xf32>
    %c0_23 = arith.constant 0 : index
    %c0_24 = arith.constant 0 : index
    %42 = vector.load %arg8[%c0_23, %c0_24] : memref<8x8xf32, #tpu.memory_space<vmem>>, vector<8x8xf32>
    %cst_25 = arith.constant dense<0.000000e+00> : vector<8x128xf32>
    %43 = tpu.matmul %42, %41, %cst_25 {dimension_numbers = #tpu.dot_dimension_numbers<[1], [0], [0], [1], [0, 0, 1, 1], [], []>} : vector<8x8xf32>, vector<8x128xf32>, vector<8x128xf32> -> vector<8x128xf32>
    %c0_26 = arith.constant 0 : index
    %c0_27 = arith.constant 0 : index
    %44 = vector.load %arg9[%c0_26, %c0_27] : memref<8x1xf32, #tpu.memory_space<vmem>>, vector<8x1xf32>
    %45 = vector.broadcast %44 : vector<8x1xf32> to vector<8x128xf32>
    %46 = arith.addf %43, %45 : vector<8x128xf32>
    %cst_28 = arith.constant 0.000000e+00 : f32
    %47 = vector.broadcast %cst_28 : f32 to vector<8x128xf32>
    %48 = arith.maximumf %46, %47 : vector<8x128xf32>
    %c0_29 = arith.constant 0 : index
    %c0_30 = arith.constant 0 : index
    %49 = vector.load %arg10[%c0_29, %c0_30] : memref<8x8xf32, #tpu.memory_space<vmem>>, vector<8x8xf32>
    %cst_31 = arith.constant dense<0.000000e+00> : vector<8x128xf32>
    %50 = tpu.matmul %49, %48, %cst_31 {dimension_numbers = #tpu.dot_dimension_numbers<[1], [0], [0], [1], [0, 0, 1, 1], [], []>} : vector<8x8xf32>, vector<8x128xf32>, vector<8x128xf32> -> vector<8x128xf32>
    %c0_32 = arith.constant 0 : index
    %c0_33 = arith.constant 0 : index
    %51 = vector.load %arg11[%c0_32, %c0_33] : memref<8x1xf32, #tpu.memory_space<vmem>>, vector<8x1xf32>
    %52 = vector.broadcast %51 : vector<8x1xf32> to vector<8x128xf32>
    %53 = arith.addf %50, %52 : vector<8x128xf32>
    %cst_34 = arith.constant 0.000000e+00 : f32
    %54 = vector.broadcast %cst_34 : f32 to vector<8x128xf32>
    %55 = arith.maximumf %53, %54 : vector<8x128xf32>
    %c0_35 = arith.constant 0 : index
    %c0_36 = arith.constant 0 : index
    %56 = vector.load %arg12[%c0_35, %c0_36] : memref<16x8xf32, #tpu.memory_space<vmem>>, vector<16x8xf32>
    %cst_37 = arith.constant dense<0.000000e+00> : vector<16x128xf32>
    %57 = tpu.matmul %56, %55, %cst_37 {dimension_numbers = #tpu.dot_dimension_numbers<[1], [0], [0], [1], [0, 0, 1, 1], [], []>} : vector<16x8xf32>, vector<8x128xf32>, vector<16x128xf32> -> vector<16x128xf32>
    %c0_38 = arith.constant 0 : index
    %c0_39 = arith.constant 0 : index
    %58 = vector.load %arg13[%c0_38, %c0_39] : memref<16x1xf32, #tpu.memory_space<vmem>>, vector<16x1xf32>
    %59 = vector.broadcast %58 : vector<16x1xf32> to vector<16x128xf32>
    %60 = arith.addf %57, %59 : vector<16x128xf32>
    %cst_40 = arith.constant 0.000000e+00 : f32
    %61 = vector.broadcast %cst_40 : f32 to vector<16x128xf32>
    %62 = arith.maximumf %60, %61 : vector<16x128xf32>
    %c0_41 = arith.constant 0 : index
    %c0_42 = arith.constant 0 : index
    %63 = vector.load %arg14[%c0_41, %c0_42] : memref<8x16xf32, #tpu.memory_space<vmem>>, vector<8x16xf32>
    %cst_43 = arith.constant dense<0.000000e+00> : vector<8x128xf32>
    %64 = tpu.matmul %63, %62, %cst_43 {dimension_numbers = #tpu.dot_dimension_numbers<[1], [0], [0], [1], [0, 0, 1, 1], [], []>} : vector<8x16xf32>, vector<16x128xf32>, vector<8x128xf32> -> vector<8x128xf32>
    %c0_44 = arith.constant 0 : index
    %c0_45 = arith.constant 0 : index
    %65 = vector.load %arg16[%c0_44, %c0_45] : memref<8x1xf32, #tpu.memory_space<vmem>>, vector<8x1xf32>
    %66 = vector.broadcast %65 : vector<8x1xf32> to vector<8x128xf32>
    %67 = arith.addf %64, %66 : vector<8x128xf32>
    %c0_46 = arith.constant 0 : index
    %c0_47 = arith.constant 0 : index
    %68 = vector.load %arg15[%c0_46, %c0_47] : memref<8x16xf32, #tpu.memory_space<vmem>>, vector<8x16xf32>
    %cst_48 = arith.constant dense<0.000000e+00> : vector<8x128xf32>
    %69 = tpu.matmul %68, %62, %cst_48 {dimension_numbers = #tpu.dot_dimension_numbers<[1], [0], [0], [1], [0, 0, 1, 1], [], []>} : vector<8x16xf32>, vector<16x128xf32>, vector<8x128xf32> -> vector<8x128xf32>
    %c0_49 = arith.constant 0 : index
    %c0_50 = arith.constant 0 : index
    %70 = vector.load %arg17[%c0_49, %c0_50] : memref<8x1xf32, #tpu.memory_space<vmem>>, vector<8x1xf32>
    %71 = vector.broadcast %70 : vector<8x1xf32> to vector<8x128xf32>
    %72 = arith.addf %69, %71 : vector<8x128xf32>
    %73 = arith.maximumf %67, %72 : vector<8x128xf32>
    %74 = arith.subf %67, %73 : vector<8x128xf32>
    %75 = math.exp %74 : vector<8x128xf32>
    %76 = arith.subf %72, %73 : vector<8x128xf32>
    %77 = math.exp %76 : vector<8x128xf32>
    %78 = arith.addf %75, %77 : vector<8x128xf32>
    %79 = arith.divf %75, %78 : vector<8x128xf32>
    %80 = vector.extract_strided_slice %79 {offsets = [0, 0], sizes = [8, 1], strides = [1, 1]} : vector<8x128xf32> to vector<8x1xf32>
    %81 = arith.divf %77, %78 : vector<8x128xf32>
    %82 = vector.extract_strided_slice %81 {offsets = [0, 0], sizes = [8, 1], strides = [1, 1]} : vector<8x128xf32> to vector<8x1xf32>
    %c0_i32_51 = arith.constant 0 : i32
    %c256_i32_52 = arith.constant 256 : i32
    %83 = arith.muli %c0_i32_51, %c256_i32_52 : i32
    %84 = tpu.assume_multiple %83, 256 : i32
    %c0_53 = arith.constant 0 : index
    %c0_54 = arith.constant 0 : index
    %85 = arith.index_cast %84 : i32 to index
    %86 = vector.load %arg1[%c0_53, %c0_54, %85] : memref<1x8x256xf32, #tpu.memory_space<vmem>>, vector<1x8x256xf32>
    %87 = vector.shape_cast %86 : vector<1x8x256xf32> to vector<8x256xf32>
    %88 = vector.broadcast %80 : vector<8x1xf32> to vector<8x256xf32>
    %89 = arith.mulf %88, %87 : vector<8x256xf32>
    %c0_55 = arith.constant 0 : index
    %c0_56 = arith.constant 0 : index
    %90 = arith.index_cast %84 : i32 to index
    %91 = vector.load %arg2[%c0_55, %c0_56, %90] : memref<1x8x256xf32, #tpu.memory_space<vmem>>, vector<1x8x256xf32>
    %92 = vector.shape_cast %91 : vector<1x8x256xf32> to vector<8x256xf32>
    %93 = vector.broadcast %82 : vector<8x1xf32> to vector<8x256xf32>
    %94 = arith.mulf %93, %92 : vector<8x256xf32>
    %95 = arith.addf %89, %94 : vector<8x256xf32>
    %c0_57 = arith.constant 0 : index
    %c0_58 = arith.constant 0 : index
    %96 = arith.index_cast %84 : i32 to index
    %97 = vector.load %arg18[%c0_57, %c0_58, %96] : memref<1x8x256xf32, #tpu.memory_space<vmem>>, vector<1x8x256xf32>
    %98 = vector.shape_cast %97 : vector<1x8x256xf32> to vector<8x256xf32>
    %99 = vector.shape_cast %95 : vector<8x256xf32> to vector<1x8x256xf32>
    tpu.vector_store %arg18[%c0_57, %c0_58, %96], %99 {strides = array<i32>} : memref<1x8x256xf32, #tpu.memory_space<vmem>>, vector<1x8x256xf32>,
    %c1_i32_59 = arith.constant 1 : i32
    return
  }
  func.func @transform_0(%arg0: i32) -> (i32, i32, i32) {
    %c0_i32 = arith.constant 0 : i32
    %c0_i32_0 = arith.constant 0 : i32
    %c0_i32_1 = arith.constant 0 : i32
    return %arg0, %c0_i32, %c0_i32_0 : i32, i32, i32
  }
  func.func @transform_1(%arg0: i32) -> (i32, i32, i32) {
    %c0_i32 = arith.constant 0 : i32
    %c0_i32_0 = arith.constant 0 : i32
    %c0_i32_1 = arith.constant 0 : i32
    return %arg0, %c0_i32, %c0_i32_0 : i32, i32, i32
  }
  func.func @transform_2(%arg0: i32) -> (i32, i32) {
    %c0_i32 = arith.constant 0 : i32
    %c0_i32_0 = arith.constant 0 : i32
    %c0_i32_1 = arith.constant 0 : i32
    return %c0_i32, %c0_i32_0 : i32, i32
  }
  func.func @transform_3(%arg0: i32) -> (i32, i32) {
    %c0_i32 = arith.constant 0 : i32
    %c0_i32_0 = arith.constant 0 : i32
    %c0_i32_1 = arith.constant 0 : i32
    return %c0_i32, %c0_i32_0 : i32, i32
  }
  func.func @transform_4(%arg0: i32) -> (i32, i32) {
    %c0_i32 = arith.constant 0 : i32
    %c0_i32_0 = arith.constant 0 : i32
    %c0_i32_1 = arith.constant 0 : i32
    return %c0_i32, %c0_i32_0 : i32, i32
  }
  func.func @transform_5(%arg0: i32) -> (i32, i32) {
    %c0_i32 = arith.constant 0 : i32
    %c0_i32_0 = arith.constant 0 : i32
    %c0_i32_1 = arith.constant 0 : i32
    return %c0_i32, %c0_i32_0 : i32, i32
  }
  func.func @transform_6(%arg0: i32) -> (i32, i32) {
    %c0_i32 = arith.constant 0 : i32
    %c0_i32_0 = arith.constant 0 : i32
    %c0_i32_1 = arith.constant 0 : i32
    return %c0_i32, %c0_i32_0 : i32, i32
  }
  func.func @transform_7(%arg0: i32) -> (i32, i32) {
    %c0_i32 = arith.constant 0 : i32
    %c0_i32_0 = arith.constant 0 : i32
    %c0_i32_1 = arith.constant 0 : i32
    return %c0_i32, %c0_i32_0 : i32, i32
  }
  func.func @transform_8(%arg0: i32) -> (i32, i32) {
    %c0_i32 = arith.constant 0 : i32
    %c0_i32_0 = arith.constant 0 : i32
    %c0_i32_1 = arith.constant 0 : i32
    return %c0_i32, %c0_i32_0 : i32, i32
  }
  func.func @transform_9(%arg0: i32) -> (i32, i32) {
    %c0_i32 = arith.constant 0 : i32
    %c0_i32_0 = arith.constant 0 : i32
    %c0_i32_1 = arith.constant 0 : i32
    return %c0_i32, %c0_i32_0 : i32, i32
  }
  func.func @transform_10(%arg0: i32) -> (i32, i32) {
    %c0_i32 = arith.constant 0 : i32
    %c0_i32_0 = arith.constant 0 : i32
    %c0_i32_1 = arith.constant 0 : i32
    return %c0_i32, %c0_i32_0 : i32, i32
  }
  func.func @transform_11(%arg0: i32) -> (i32, i32) {
    %c0_i32 = arith.constant 0 : i32
    %c0_i32_0 = arith.constant 0 : i32
    %c0_i32_1 = arith.constant 0 : i32
    return %c0_i32, %c0_i32_0 : i32, i32
  }
  func.func @transform_12(%arg0: i32) -> (i32, i32) {
    %c0_i32 = arith.constant 0 : i32
    %c0_i32_0 = arith.constant 0 : i32
    %c0_i32_1 = arith.constant 0 : i32
    return %c0_i32, %c0_i32_0 : i32, i32
  }
  func.func @transform_13(%arg0: i32) -> (i32, i32) {
    %c0_i32 = arith.constant 0 : i32
    %c0_i32_0 = arith.constant 0 : i32
    %c0_i32_1 = arith.constant 0 : i32
    return %c0_i32, %c0_i32_0 : i32, i32
  }
  func.func @transform_14(%arg0: i32) -> (i32, i32) {
    %c0_i32 = arith.constant 0 : i32
    %c0_i32_0 = arith.constant 0 : i32
    %c0_i32_1 = arith.constant 0 : i32
    return %c0_i32, %c0_i32_0 : i32, i32
  }
  func.func @transform_15(%arg0: i32) -> (i32, i32) {
    %c0_i32 = arith.constant 0 : i32
    %c0_i32_0 = arith.constant 0 : i32
    %c0_i32_1 = arith.constant 0 : i32
    return %c0_i32, %c0_i32_0 : i32, i32
  }
  func.func @transform_16(%arg0: i32) -> (i32, i32) {
    %c0_i32 = arith.constant 0 : i32
    %c0_i32_0 = arith.constant 0 : i32
    %c0_i32_1 = arith.constant 0 : i32
    return %c0_i32, %c0_i32_0 : i32, i32
  }
  func.func @transform_17(%arg0: i32) -> (i32, i32, i32) {
    %c0_i32 = arith.constant 0 : i32
    %c0_i32_0 = arith.constant 0 : i32
    %c0_i32_1 = arith.constant 0 : i32
    return %arg0, %c0_i32, %c0_i32_0 : i32, i32, i32
  }
}

</mosaic_0001>

<llo_original>
// kernel: tpu_custom_call.1
$region0: #{tpu_custom_call.1}
  #allocation0 [shape = 'u32[]', space=smem, size = 0x4, offset = 0x4, fixed_abs, tag = 'smem constant byte address 0x4 - core index']
  #allocation1 [shape = 'u32[72,128]{1,0:T(1,128)}', space=vmem, size = 0x9000, scoped, tag = 'internal scratch']
  %s0 = inlined_call_operand.vmem [shape: f32[2,8,256], index: 0, kind: input, shape index: {}]
  %s1 = inlined_call_operand.vmem [shape: f32[2,8,256], index: 1, kind: input, shape index: {}]
  %s2 = inlined_call_operand.vmem [shape: f32[16,8], index: 2, kind: input, shape index: {}]
  %s3 = inlined_call_operand.vmem [shape: f32[16,8], index: 3, kind: input, shape index: {}]
  %s4 = inlined_call_operand.vmem [shape: f32[16,1], index: 4, kind: input, shape index: {}]
  %s5 = inlined_call_operand.vmem [shape: f32[8,16], index: 5, kind: input, shape index: {}]
  %s6 = inlined_call_operand.vmem [shape: f32[8,1], index: 6, kind: input, shape index: {}]
  %s7 = inlined_call_operand.vmem [shape: f32[8,8], index: 7, kind: input, shape index: {}]
  %s8 = inlined_call_operand.vmem [shape: f32[8,1], index: 8, kind: input, shape index: {}]
  %s9 = inlined_call_operand.vmem [shape: f32[8,8], index: 9, kind: input, shape index: {}]
  %s10 = inlined_call_operand.vmem [shape: f32[8,1], index: 10, kind: input, shape index: {}]
  %s11 = inlined_call_operand.vmem [shape: f32[16,8], index: 11, kind: input, shape index: {}]
  %s12 = inlined_call_operand.vmem [shape: f32[16,1], index: 12, kind: input, shape index: {}]
  %s13 = inlined_call_operand.vmem [shape: f32[8,16], index: 13, kind: input, shape index: {}]
  %s14 = inlined_call_operand.vmem [shape: f32[8,16], index: 14, kind: input, shape index: {}]
  %s15 = inlined_call_operand.vmem [shape: f32[8,1], index: 15, kind: input, shape index: {}]
  %s16 = inlined_call_operand.vmem [shape: f32[8,1], index: 16, kind: input, shape index: {}]
  %s17 = inlined_call_operand.hbm [shape: f32[2,8,256], index: 17, kind: output, shape index: {}]
  %s18 = sld [smem:[#allocation0]]
  $region101: #{tpu_custom_call.1} parent=0
    _
  %s20 = ssub.s32 1, %s18
  %s21 = scalar_select 0, %s20, %s18
  $region1: #{tpu_custom_call.1} parent=0
    #allocation2 [shape = 'u8[16384]{0}', space=vmem, size = 0x4000, scoped, tag = 'output window, operand 0']
    #allocation3 [shape = 's32[2]{0}', space=sflag, size = 0x8, scoped, tag = 'scoped memory for tpu_custom_call.1']
    %22 = vsyncpa [#allocation3], 0
    %s23 = scalar_lea.sflag [#allocation3], 1
    %24 = vsyncpa %s23, 0
    loop: start=0, step=1, limit=4
    $region2: #{tpu_custom_call.1} parent=1 // loop_pre_header
      _
    $region3: #{tpu_custom_call.1} parent=1 // loop_header
      %s26 = sphi 0, %s30
      %p27 = scmp.ge.s32.totalorder %s26, 4
      %s36 = sphi 0, %s38
      %s39 = sphi 0, %s36
      %s40 = sphi 0, %s39
      %s56 = sphi 0, %s40
      %s62 = sphi 0, %s64
      %s65 = sphi 0, %s62
      %s66 = sphi 0, %s65
      %s82 = sphi 0, %s66
      %s86 = sphi 0, %s86
      %s88 = sphi 0, %s86
      %s89 = sphi 0, %s88
      %s103 = sphi 0, %s89
      %s107 = sphi 0, %s107
      %s109 = sphi 0, %s107
      %s110 = sphi 0, %s109
      %s124 = sphi 0, %s110
      %s128 = sphi 0, %s128
      %s130 = sphi 0, %s128
      %s131 = sphi 0, %s130
      %s145 = sphi 0, %s131
      %s149 = sphi 0, %s149
      %s151 = sphi 0, %s149
      %s152 = sphi 0, %s151
      %s166 = sphi 0, %s152
      %s170 = sphi 0, %s170
      %s172 = sphi 0, %s170
      %s173 = sphi 0, %s172
      %s187 = sphi 0, %s173
      %s191 = sphi 0, %s191
      %s193 = sphi 0, %s191
      %s194 = sphi 0, %s193
      %s208 = sphi 0, %s194
      %s212 = sphi 0, %s212
      %s214 = sphi 0, %s212
      %s215 = sphi 0, %s214
      %s229 = sphi 0, %s215
      %s233 = sphi 0, %s233
      %s235 = sphi 0, %s233
      %s236 = sphi 0, %s235
      %s250 = sphi 0, %s236
      %s254 = sphi 0, %s254
      %s256 = sphi 0, %s254
      %s257 = sphi 0, %s256
      %s271 = sphi 0, %s257
      %s275 = sphi 0, %s275
      %s277 = sphi 0, %s275
      %s278 = sphi 0, %s277
      %s292 = sphi 0, %s278
      %s296 = sphi 0, %s296
      %s298 = sphi 0, %s296
      %s299 = sphi 0, %s298
      %s313 = sphi 0, %s299
      %s317 = sphi 0, %s317
      %s319 = sphi 0, %s317
      %s320 = sphi 0, %s319
      %s334 = sphi 0, %s320
      %s338 = sphi 0, %s338
      %s340 = sphi 0, %s338
      %s341 = sphi 0, %s340
      %s355 = sphi 0, %s341
      %s359 = sphi 0, %s359
      %s361 = sphi 0, %s359
      %s362 = sphi 0, %s361
      %s376 = sphi 0, %s362
      %s380 = sphi 0, %s380
      %s382 = sphi 0, %s380
      %s383 = sphi 0, %s382
      %s397 = sphi 0, %s383
      %s403 = sphi 0, %s405
      %s406 = sphi 0, %s403
      %s407 = sphi 0, %s406
      %s423 = sphi 0, %s407
    $region4: #{tpu_custom_call.1} parent=1 // loop_header_branch
      %29 = sbr.rel (%p27) target = $region8
    $region5: #{tpu_custom_call.1} parent=1 // loop_body
      %s31 = ssub.s32 %s26, 1
      %s32 = ssub.s32 %s26, 2
      %s33 = sadd.s32 %s26, 1
      %s34 = ssub.s32 %s26, %s33
      %p35 = scmp.eq.s32.totalorder %s34, 0
      %s37 = sadd.s32 %s36, 1
      %s38 = scalar_select %p35, %s36, %s37
      %p41 = pneg %p35
      %p42 = scmp.eq.s32.totalorder %s26, 1
      %p43 = por %p41, %p42
      %p44 = scmp.ne.s32.totalorder %s36, %s39
      %p45 = scmp.eq.s32.totalorder %s26, 0
      %p46 = por %p44, %p45
      %p47 = scmp.ne.s32.totalorder %s36, %s39
      %p48 = scmp.eq.s32.totalorder %s31, 1
      %p49 = por %p47, %p48
      %p50 = scmp.ne.s32.totalorder %s39, %s40
      %p51 = scmp.eq.s32.totalorder %s31, 0
      %p52 = por %p50, %p51
      %p53 = scmp.ne.s32.totalorder %s39, %s40
      %p54 = scmp.eq.s32.totalorder %s32, 1
      %p55 = por %p53, %p54
      %p57 = scmp.ne.s32.totalorder %s40, %s56
      %p58 = scmp.eq.s32.totalorder %s32, 0
      %p59 = por %p57, %p58
      %s60 = ssub.s32 %s26, %s33
      %p61 = scmp.eq.s32.totalorder %s60, 0
      %s63 = sadd.s32 %s62, 1
      %s64 = scalar_select %p61, %s62, %s63
      %p67 = pneg %p61
      %p68 = scmp.eq.s32.totalorder %s26, 1
      %p69 = por %p67, %p68
      %p70 = scmp.ne.s32.totalorder %s62, %s65
      %p71 = scmp.eq.s32.totalorder %s26, 0
      %p72 = por %p70, %p71
      %p73 = scmp.ne.s32.totalorder %s62, %s65
      %p74 = scmp.eq.s32.totalorder %s31, 1
      %p75 = por %p73, %p74
      %p76 = scmp.ne.s32.totalorder %s65, %s66
      %p77 = scmp.eq.s32.totalorder %s31, 0
      %p78 = por %p76, %p77
      %p79 = scmp.ne.s32.totalorder %s65, %s66
      %p80 = scmp.eq.s32.totalorder %s32, 1
      %p81 = por %p79, %p80
      %p83 = scmp.ne.s32.totalorder %s66, %s82
      %p84 = scmp.eq.s32.totalorder %s32, 0
      %p85 = por %p83, %p84
      %s87 = sadd.s32 %s86, 1
      %p90 = scmp.eq.s32.totalorder %s26, 1
      %p91 = scmp.ne.s32.totalorder %s86, %s88
      %p92 = scmp.eq.s32.totalorder %s26, 0
      %p93 = por %p91, %p92
      %p94 = scmp.ne.s32.totalorder %s86, %s88
      %p95 = scmp.eq.s32.totalorder %s31, 1
      %p96 = por %p94, %p95
      %p97 = scmp.ne.s32.totalorder %s88, %s89
      %p98 = scmp.eq.s32.totalorder %s31, 0
      %p99 = por %p97, %p98
      %p100 = scmp.ne.s32.totalorder %s88, %s89
      %p101 = scmp.eq.s32.totalorder %s32, 1
      %p102 = por %p100, %p101
      %p104 = scmp.ne.s32.totalorder %s89, %s103
      %p105 = scmp.eq.s32.totalorder %s32, 0
      %p106 = por %p104, %p105
      %s108 = sadd.s32 %s107, 1
      %p111 = scmp.eq.s32.totalorder %s26, 1
      %p112 = scmp.ne.s32.totalorder %s107, %s109
      %p113 = scmp.eq.s32.totalorder %s26, 0
      %p114 = por %p112, %p113
      %p115 = scmp.ne.s32.totalorder %s107, %s109
      %p116 = scmp.eq.s32.totalorder %s31, 1
      %p117 = por %p115, %p116
      %p118 = scmp.ne.s32.totalorder %s109, %s110
      %p119 = scmp.eq.s32.totalorder %s31, 0
      %p120 = por %p118, %p119
      %p121 = scmp.ne.s32.totalorder %s109, %s110
      %p122 = scmp.eq.s32.totalorder %s32, 1
      %p123 = por %p121, %p122
      %p125 = scmp.ne.s32.totalorder %s110, %s124
      %p126 = scmp.eq.s32.totalorder %s32, 0
      %p127 = por %p125, %p126
      %s129 = sadd.s32 %s128, 1
      %p132 = scmp.eq.s32.totalorder %s26, 1
      %p133 = scmp.ne.s32.totalorder %s128, %s130
      %p134 = scmp.eq.s32.totalorder %s26, 0
      %p135 = por %p133, %p134
      %p136 = scmp.ne.s32.totalorder %s128, %s130
      %p137 = scmp.eq.s32.totalorder %s31, 1
      %p138 = por %p136, %p137
      %p139 = scmp.ne.s32.totalorder %s130, %s131
      %p140 = scmp.eq.s32.totalorder %s31, 0
      %p141 = por %p139, %p140
      %p142 = scmp.ne.s32.totalorder %s130, %s131
      %p143 = scmp.eq.s32.totalorder %s32, 1
      %p144 = por %p142, %p143
      %p146 = scmp.ne.s32.totalorder %s131, %s145
      %p147 = scmp.eq.s32.totalorder %s32, 0
      %p148 = por %p146, %p147
      %s150 = sadd.s32 %s149, 1
      %p153 = scmp.eq.s32.totalorder %s26, 1
      %p154 = scmp.ne.s32.totalorder %s149, %s151
      %p155 = scmp.eq.s32.totalorder %s26, 0
      %p156 = por %p154, %p155
      %p157 = scmp.ne.s32.totalorder %s149, %s151
      %p158 = scmp.eq.s32.totalorder %s31, 1
      %p159 = por %p157, %p158
      %p160 = scmp.ne.s32.totalorder %s151, %s152
      %p161 = scmp.eq.s32.totalorder %s31, 0
      %p162 = por %p160, %p161
      %p163 = scmp.ne.s32.totalorder %s151, %s152
      %p164 = scmp.eq.s32.totalorder %s32, 1
      %p165 = por %p163, %p164
      %p167 = scmp.ne.s32.totalorder %s152, %s166
      %p168 = scmp.eq.s32.totalorder %s32, 0
      %p169 = por %p167, %p168
      %s171 = sadd.s32 %s170, 1
      %p174 = scmp.eq.s32.totalorder %s26, 1
      %p175 = scmp.ne.s32.totalorder %s170, %s172
      %p176 = scmp.eq.s32.totalorder %s26, 0
      %p177 = por %p175, %p176
      %p178 = scmp.ne.s32.totalorder %s170, %s172
      %p179 = scmp.eq.s32.totalorder %s31, 1
      %p180 = por %p178, %p179
      %p181 = scmp.ne.s32.totalorder %s172, %s173
      %p182 = scmp.eq.s32.totalorder %s31, 0
      %p183 = por %p181, %p182
      %p184 = scmp.ne.s32.totalorder %s172, %s173
      %p185 = scmp.eq.s32.totalorder %s32, 1
      %p186 = por %p184, %p185
      %p188 = scmp.ne.s32.totalorder %s173, %s187
      %p189 = scmp.eq.s32.totalorder %s32, 0
      %p190 = por %p188, %p189
      %s192 = sadd.s32 %s191, 1
      %p195 = scmp.eq.s32.totalorder %s26, 1
      %p196 = scmp.ne.s32.totalorder %s191, %s193
      %p197 = scmp.eq.s32.totalorder %s26, 0
      %p198 = por %p196, %p197
      %p199 = scmp.ne.s32.totalorder %s191, %s193
      %p200 = scmp.eq.s32.totalorder %s31, 1
      %p201 = por %p199, %p200
      %p202 = scmp.ne.s32.totalorder %s193, %s194
      %p203 = scmp.eq.s32.totalorder %s31, 0
      %p204 = por %p202, %p203
      %p205 = scmp.ne.s32.totalorder %s193, %s194
      %p206 = scmp.eq.s32.totalorder %s32, 1
      %p207 = por %p205, %p206
      %p209 = scmp.ne.s32.totalorder %s194, %s208
      %p210 = scmp.eq.s32.totalorder %s32, 0
      %p211 = por %p209, %p210
      %s213 = sadd.s32 %s212, 1
      %p216 = scmp.eq.s32.totalorder %s26, 1
      %p217 = scmp.ne.s32.totalorder %s212, %s214
      %p218 = scmp.eq.s32.totalorder %s26, 0
      %p219 = por %p217, %p218
      %p220 = scmp.ne.s32.totalorder %s212, %s214
      %p221 = scmp.eq.s32.totalorder %s31, 1
      %p222 = por %p220, %p221
      %p223 = scmp.ne.s32.totalorder %s214, %s215
      %p224 = scmp.eq.s32.totalorder %s31, 0
      %p225 = por %p223, %p224
      %p226 = scmp.ne.s32.totalorder %s214, %s215
      %p227 = scmp.eq.s32.totalorder %s32, 1
      %p228 = por %p226, %p227
      %p230 = scmp.ne.s32.totalorder %s215, %s229
      %p231 = scmp.eq.s32.totalorder %s32, 0
      %p232 = por %p230, %p231
      %s234 = sadd.s32 %s233, 1
      %p237 = scmp.eq.s32.totalorder %s26, 1
      %p238 = scmp.ne.s32.totalorder %s233, %s235
      %p239 = scmp.eq.s32.totalorder %s26, 0
      %p240 = por %p238, %p239
      %p241 = scmp.ne.s32.totalorder %s233, %s235
      %p242 = scmp.eq.s32.totalorder %s31, 1
      %p243 = por %p241, %p242
      %p244 = scmp.ne.s32.totalorder %s235, %s236
      %p245 = scmp.eq.s32.totalorder %s31, 0
      %p246 = por %p244, %p245
      %p247 = scmp.ne.s32.totalorder %s235, %s236
      %p248 = scmp.eq.s32.totalorder %s32, 1
      %p249 = por %p247, %p248
      %p251 = scmp.ne.s32.totalorder %s236, %s250
      %p252 = scmp.eq.s32.totalorder %s32, 0
      %p253 = por %p251, %p252
      %s255 = sadd.s32 %s254, 1
      %p258 = scmp.eq.s32.totalorder %s26, 1
      %p259 = scmp.ne.s32.totalorder %s254, %s256
      %p260 = scmp.eq.s32.totalorder %s26, 0
      %p261 = por %p259, %p260
      %p262 = scmp.ne.s32.totalorder %s254, %s256
      %p263 = scmp.eq.s32.totalorder %s31, 1
      %p264 = por %p262, %p263
      %p265 = scmp.ne.s32.totalorder %s256, %s257
      %p266 = scmp.eq.s32.totalorder %s31, 0
      %p267 = por %p265, %p266
      %p268 = scmp.ne.s32.totalorder %s256, %s257
      %p269 = scmp.eq.s32.totalorder %s32, 1
      %p270 = por %p268, %p269
      %p272 = scmp.ne.s32.totalorder %s257, %s271
      %p273 = scmp.eq.s32.totalorder %s32, 0
      %p274 = por %p272, %p273
      %s276 = sadd.s32 %s275, 1
      %p279 = scmp.eq.s32.totalorder %s26, 1
      %p280 = scmp.ne.s32.totalorder %s275, %s277
      %p281 = scmp.eq.s32.totalorder %s26, 0
      %p282 = por %p280, %p281
      %p283 = scmp.ne.s32.totalorder %s275, %s277
      %p284 = scmp.eq.s32.totalorder %s31, 1
      %p285 = por %p283, %p284
      %p286 = scmp.ne.s32.totalorder %s277, %s278
      %p287 = scmp.eq.s32.totalorder %s31, 0
      %p288 = por %p286, %p287
      %p289 = scmp.ne.s32.totalorder %s277, %s278
      %p290 = scmp.eq.s32.totalorder %s32, 1
      %p291 = por %p289, %p290
      %p293 = scmp.ne.s32.totalorder %s278, %s292
      %p294 = scmp.eq.s32.totalorder %s32, 0
      %p295 = por %p293, %p294
      %s297 = sadd.s32 %s296, 1
      %p300 = scmp.eq.s32.totalorder %s26, 1
      %p301 = scmp.ne.s32.totalorder %s296, %s298
      %p302 = scmp.eq.s32.totalorder %s26, 0
      %p303 = por %p301, %p302
      %p304 = scmp.ne.s32.totalorder %s296, %s298
      %p305 = scmp.eq.s32.totalorder %s31, 1
      %p306 = por %p304, %p305
      %p307 = scmp.ne.s32.totalorder %s298, %s299
      %p308 = scmp.eq.s32.totalorder %s31, 0
      %p309 = por %p307, %p308
      %p310 = scmp.ne.s32.totalorder %s298, %s299
      %p311 = scmp.eq.s32.totalorder %s32, 1
      %p312 = por %p310, %p311
      %p314 = scmp.ne.s32.totalorder %s299, %s313
      %p315 = scmp.eq.s32.totalorder %s32, 0
      %p316 = por %p314, %p315
      %s318 = sadd.s32 %s317, 1
      %p321 = scmp.eq.s32.totalorder %s26, 1
      %p322 = scmp.ne.s32.totalorder %s317, %s319
      %p323 = scmp.eq.s32.totalorder %s26, 0
      %p324 = por %p322, %p323
      %p325 = scmp.ne.s32.totalorder %s317, %s319
      %p326 = scmp.eq.s32.totalorder %s31, 1
      %p327 = por %p325, %p326
      %p328 = scmp.ne.s32.totalorder %s319, %s320
      %p329 = scmp.eq.s32.totalorder %s31, 0
      %p330 = por %p328, %p329
      %p331 = scmp.ne.s32.totalorder %s319, %s320
      %p332 = scmp.eq.s32.totalorder %s32, 1
      %p333 = por %p331, %p332
      %p335 = scmp.ne.s32.totalorder %s320, %s334
      %p336 = scmp.eq.s32.totalorder %s32, 0
      %p337 = por %p335, %p336
      %s339 = sadd.s32 %s338, 1
      %p342 = scmp.eq.s32.totalorder %s26, 1
      %p343 = scmp.ne.s32.totalorder %s338, %s340
      %p344 = scmp.eq.s32.totalorder %s26, 0
      %p345 = por %p343, %p344
      %p346 = scmp.ne.s32.totalorder %s338, %s340
      %p347 = scmp.eq.s32.totalorder %s31, 1
      %p348 = por %p346, %p347
      %p349 = scmp.ne.s32.totalorder %s340, %s341
      %p350 = scmp.eq.s32.totalorder %s31, 0
      %p351 = por %p349, %p350
      %p352 = scmp.ne.s32.totalorder %s340, %s341
      %p353 = scmp.eq.s32.totalorder %s32, 1
      %p354 = por %p352, %p353
      %p356 = scmp.ne.s32.totalorder %s341, %s355
      %p357 = scmp.eq.s32.totalorder %s32, 0
      %p358 = por %p356, %p357
      %s360 = sadd.s32 %s359, 1
      %p363 = scmp.eq.s32.totalorder %s26, 1
      %p364 = scmp.ne.s32.totalorder %s359, %s361
      %p365 = scmp.eq.s32.totalorder %s26, 0
      %p366 = por %p364, %p365
      %p367 = scmp.ne.s32.totalorder %s359, %s361
      %p368 = scmp.eq.s32.totalorder %s31, 1
      %p369 = por %p367, %p368
      %p370 = scmp.ne.s32.totalorder %s361, %s362
      %p371 = scmp.eq.s32.totalorder %s31, 0
      %p372 = por %p370, %p371
      %p373 = scmp.ne.s32.totalorder %s361, %s362
      %p374 = scmp.eq.s32.totalorder %s32, 1
      %p375 = por %p373, %p374
      %p377 = scmp.ne.s32.totalorder %s362, %s376
      %p378 = scmp.eq.s32.totalorder %s32, 0
      %p379 = por %p377, %p378
      %s381 = sadd.s32 %s380, 1
      %p384 = scmp.eq.s32.totalorder %s26, 1
      %p385 = scmp.ne.s32.totalorder %s380, %s382
      %p386 = scmp.eq.s32.totalorder %s26, 0
      %p387 = por %p385, %p386
      %p388 = scmp.ne.s32.totalorder %s380, %s382
      %p389 = scmp.eq.s32.totalorder %s31, 1
      %p390 = por %p388, %p389
      %p391 = scmp.ne.s32.totalorder %s382, %s383
      %p392 = scmp.eq.s32.totalorder %s31, 0
      %p393 = por %p391, %p392
      %p394 = scmp.ne.s32.totalorder %s382, %s383
      %p395 = scmp.eq.s32.totalorder %s32, 1
      %p396 = por %p394, %p395
      %p398 = scmp.ne.s32.totalorder %s383, %s397
      %p399 = scmp.eq.s32.totalorder %s32, 0
      %p400 = por %p398, %p399
      %s401 = ssub.s32 %s26, %s33
      %p402 = scmp.eq.s32.totalorder %s401, 0
      %s404 = sadd.s32 %s403, 1
      %s405 = scalar_select %p402, %s403, %s404
      %p408 = pneg %p402
      %p409 = scmp.eq.s32.totalorder %s26, 1
      %p410 = por %p408, %p409
      %p411 = scmp.ne.s32.totalorder %s403, %s406
      %p412 = scmp.eq.s32.totalorder %s26, 0
      %p413 = por %p411, %p412
      %p414 = scmp.ne.s32.totalorder %s403, %s406
      %p415 = scmp.eq.s32.totalorder %s31, 1
      %p416 = por %p414, %p415
      %p417 = scmp.ne.s32.totalorder %s406, %s407
      %p418 = scmp.eq.s32.totalorder %s31, 0
      %p419 = por %p417, %p418
      %p420 = scmp.ne.s32.totalorder %s406, %s407
      %p421 = scmp.eq.s32.totalorder %s32, 1
      %p422 = por %p420, %p421
      %p424 = scmp.ne.s32.totalorder %s407, %s423
      %p425 = scmp.eq.s32.totalorder %s32, 0
      %p426 = por %p424, %p425
      %p427 = scmp.le.s32.totalorder 1, %s26
      %p428 = scmp.lt.s32.totalorder %s26, 3
      %p429 = pnand %p427, %p428
      %p430 = pneg %p429
      // Predicated region
      $region9: #{tpu_custom_call.1} parent=5 // pred_check
        _
      $region10: #{tpu_custom_call.1} parent=5 // pred_check_branch
        %432 = sbr.rel (%p429) target = $region12
      $region11: #{tpu_custom_call.1} parent=5 // pred_region
        %s433 = ssub.s32 %s26, 1
        // Predicated region
        $region13: #{tpu_custom_call.1} parent=11 // pred_check
          %p434 = pneg %p99
        $region14: #{tpu_custom_call.1} parent=11 // pred_check_branch
          %436 = sbr.rel (%p434) target = $region16
        $region15: #{tpu_custom_call.1} parent=11 // pred_region
          _
        $region16: #{tpu_custom_call.1} parent=11 // pred_fallthru
          _
        // Predicated region
        $region17: #{tpu_custom_call.1} parent=11 // pred_check
          %p437 = pneg %p120
        $region18: #{tpu_custom_call.1} parent=11 // pred_check_branch
          %439 = sbr.rel (%p437) target = $region20
        $region19: #{tpu_custom_call.1} parent=11 // pred_region
          _
        $region20: #{tpu_custom_call.1} parent=11 // pred_fallthru
          _
        // Predicated region
        $region21: #{tpu_custom_call.1} parent=11 // pred_check
          %p440 = pneg %p141
        $region22: #{tpu_custom_call.1} parent=11 // pred_check_branch
          %442 = sbr.rel (%p440) target = $region24
        $region23: #{tpu_custom_call.1} parent=11 // pred_region
          _
        $region24: #{tpu_custom_call.1} parent=11 // pred_fallthru
          _
        // Predicated region
        $region25: #{tpu_custom_call.1} parent=11 // pred_check
          %p443 = pneg %p162
        $region26: #{tpu_custom_call.1} parent=11 // pred_check_branch
          %445 = sbr.rel (%p443) target = $region28
        $region27: #{tpu_custom_call.1} parent=11 // pred_region
          _
        $region28: #{tpu_custom_call.1} parent=11 // pred_fallthru
          _
        // Predicated region
        $region29: #{tpu_custom_call.1} parent=11 // pred_check
          %p446 = pneg %p183
        $region30: #{tpu_custom_call.1} parent=11 // pred_check_branch
          %448 = sbr.rel (%p446) target = $region32
        $region31: #{tpu_custom_call.1} parent=11 // pred_region
          _
        $region32: #{tpu_custom_call.1} parent=11 // pred_fallthru
          _
        // Predicated region
        $region33: #{tpu_custom_call.1} parent=11 // pred_check
          %p449 = pneg %p204
        $region34: #{tpu_custom_call.1} parent=11 // pred_check_branch
          %451 = sbr.rel (%p449) target = $region36
        $region35: #{tpu_custom_call.1} parent=11 // pred_region
          _
        $region36: #{tpu_custom_call.1} parent=11 // pred_fallthru
          _
        // Predicated region
        $region37: #{tpu_custom_call.1} parent=11 // pred_check
          %p452 = pneg %p225
        $region38: #{tpu_custom_call.1} parent=11 // pred_check_branch
          %454 = sbr.rel (%p452) target = $region40
        $region39: #{tpu_custom_call.1} parent=11 // pred_region
          _
        $region40: #{tpu_custom_call.1} parent=11 // pred_fallthru
          _
        // Predicated region
        $region41: #{tpu_custom_call.1} parent=11 // pred_check
          %p455 = pneg %p246
        $region42: #{tpu_custom_call.1} parent=11 // pred_check_branch
          %457 = sbr.rel (%p455) target = $region44
        $region43: #{tpu_custom_call.1} parent=11 // pred_region
          _
        $region44: #{tpu_custom_call.1} parent=11 // pred_fallthru
          _
        // Predicated region
        $region45: #{tpu_custom_call.1} parent=11 // pred_check
          %p458 = pneg %p267
        $region46: #{tpu_custom_call.1} parent=11 // pred_check_branch
          %460 = sbr.rel (%p458) target = $region48
        $region47: #{tpu_custom_call.1} parent=11 // pred_region
          _
        $region48: #{tpu_custom_call.1} parent=11 // pred_fallthru
          _
        // Predicated region
        $region49: #{tpu_custom_call.1} parent=11 // pred_check
          %p461 = pneg %p288
        $region50: #{tpu_custom_call.1} parent=11 // pred_check_branch
          %463 = sbr.rel (%p461) target = $region52
        $region51: #{tpu_custom_call.1} parent=11 // pred_region
          _
        $region52: #{tpu_custom_call.1} parent=11 // pred_fallthru
          _
        // Predicated region
        $region53: #{tpu_custom_call.1} parent=11 // pred_check
          %p464 = pneg %p309
        $region54: #{tpu_custom_call.1} parent=11 // pred_check_branch
          %466 = sbr.rel (%p464) target = $region56
        $region55: #{tpu_custom_call.1} parent=11 // pred_region
          _
        $region56: #{tpu_custom_call.1} parent=11 // pred_fallthru
          _
        // Predicated region
        $region57: #{tpu_custom_call.1} parent=11 // pred_check
          %p467 = pneg %p330
        $region58: #{tpu_custom_call.1} parent=11 // pred_check_branch
          %469 = sbr.rel (%p467) target = $region60
        $region59: #{tpu_custom_call.1} parent=11 // pred_region
          _
        $region60: #{tpu_custom_call.1} parent=11 // pred_fallthru
          _
        // Predicated region
        $region61: #{tpu_custom_call.1} parent=11 // pred_check
          %p470 = pneg %p351
        $region62: #{tpu_custom_call.1} parent=11 // pred_check_branch
          %472 = sbr.rel (%p470) target = $region64
        $region63: #{tpu_custom_call.1} parent=11 // pred_region
          _
        $region64: #{tpu_custom_call.1} parent=11 // pred_fallthru
          _
        // Predicated region
        $region65: #{tpu_custom_call.1} parent=11 // pred_check
          %p473 = pneg %p372
        $region66: #{tpu_custom_call.1} parent=11 // pred_check_branch
          %475 = sbr.rel (%p473) target = $region68
        $region67: #{tpu_custom_call.1} parent=11 // pred_region
          _
        $region68: #{tpu_custom_call.1} parent=11 // pred_fallthru
          _
        // Predicated region
        $region69: #{tpu_custom_call.1} parent=11 // pred_check
          %p476 = pneg %p393
        $region70: #{tpu_custom_call.1} parent=11 // pred_check_branch
          %478 = sbr.rel (%p476) target = $region72
        $region71: #{tpu_custom_call.1} parent=11 // pred_region
          _
        $region72: #{tpu_custom_call.1} parent=11 // pred_fallthru
          _
      $region12: #{tpu_custom_call.1} parent=5 // pred_fallthru
        _
      %p479 = scmp.lt.s32.totalorder %s26, 2
      // Predicated region
      $region73: #{tpu_custom_call.1} parent=5 // pred_check
        %p480 = pneg %p479
      $region74: #{tpu_custom_call.1} parent=5 // pred_check_branch
        %482 = sbr.rel (%p480) target = $region76
      $region75: #{tpu_custom_call.1} parent=5 // pred_region
        // Predicated region
        $region77: #{tpu_custom_call.1} parent=75 // pred_check
          %p483 = pneg %p46
        $region78: #{tpu_custom_call.1} parent=75 // pred_check_branch
          %485 = sbr.rel (%p483) target = $region80
        $region79: #{tpu_custom_call.1} parent=75 // pred_region
          %p486 = scmp.lt.s32.totalorder %s26, 1
          %s487 = scalar_select %p486, %s26, 1
          %s488 = smul.addr %s487, 2
          %s489 = smul.addr %s488, 8
          %s490 = scalar_lea.vmem %s0, %s489
        $region80: #{tpu_custom_call.1} parent=75 // pred_fallthru
          _
        // Predicated region
        $region81: #{tpu_custom_call.1} parent=75 // pred_check
          %p491 = pneg %p72
        $region82: #{tpu_custom_call.1} parent=75 // pred_check_branch
          %493 = sbr.rel (%p491) target = $region84
        $region83: #{tpu_custom_call.1} parent=75 // pred_region
          %p494 = scmp.lt.s32.totalorder %s26, 1
          %s495 = scalar_select %p494, %s26, 1
          %s496 = smul.addr %s495, 2
          %s497 = smul.addr %s496, 8
          %s498 = scalar_lea.vmem %s1, %s497
        $region84: #{tpu_custom_call.1} parent=75 // pred_fallthru
          _
      $region76: #{tpu_custom_call.1} parent=5 // pred_fallthru
        _
      %p499 = scmp.le.s32.totalorder 1, %s26
      %p500 = scmp.lt.s32.totalorder %s26, 3
      %p501 = pnand %p499, %p500
      %p502 = pneg %p501
      // Predicated region
      $region85: #{tpu_custom_call.1} parent=5 // pred_check
        _
      $region86: #{tpu_custom_call.1} parent=5 // pred_check_branch
        %504 = sbr.rel (%p501) target = $region88
      $region87: #{tpu_custom_call.1} parent=5 // pred_region
        %s505 = ssub.s32 %s26, 1
        %p506 = scmp.lt.s32.totalorder %s31, 1
        %s507 = scalar_select %p506, %s31, 1
        %s508 = smul.addr %s507, 2
        %s509 = smul.addr %s508, 8
        %s510 = scalar_lea.vmem %s0, %s509
        %p511 = pneg %p52
        %p512 = pneg %p49
        %p513 = scmp.lt.s32.totalorder %s31, 1
        %s514 = scalar_select %p513, %s31, 1
        %s515 = smul.addr %s514, 2
        %s516 = smul.addr %s515, 8
        %s517 = scalar_lea.vmem %s1, %s516
        %p518 = pneg %p78
        %p519 = pneg %p75
        %p520 = pneg %p99
        %p521 = pneg %p96
        %p522 = pneg %p120
        %p523 = pneg %p117
        %p524 = pneg %p141
        %p525 = pneg %p138
        %p526 = pneg %p162
        %p527 = pneg %p159
        %p528 = pneg %p183
        %p529 = pneg %p180
        %p530 = pneg %p204
        %p531 = pneg %p201
        %p532 = pneg %p225
        %p533 = pneg %p222
        %p534 = pneg %p246
        %p535 = pneg %p243
        %p536 = pneg %p267
        %p537 = pneg %p264
        %p538 = pneg %p288
        %p539 = pneg %p285
        %p540 = pneg %p309
        %p541 = pneg %p306
        %p542 = pneg %p330
        %p543 = pneg %p327
        %p544 = pneg %p351
        %p545 = pneg %p348
        %p546 = pneg %p372
        %p547 = pneg %p369
        %p548 = pneg %p393
        %p549 = pneg %p390
        %p550 = pneg %p419
        %p551 = pneg %p416
        %s552 = sand.u32 %s406, 1
        %s553 = scalar_lea.sflag [#allocation3], %s552
        %s554 = sand.u32 %s406, 1
        %s555 = smul.addr %s554, 16
        %s556 = scalar_lea.vmem [#allocation2], %s555
        %p557 = scmp.lt.s32.totalorder %s31, 1
        %s558 = scalar_select %p557, %s31, 1
        %s559 = smul.addr %s558, 2
        %s560 = smul.addr %s559, 8
        %s561 = scalar_lea.vmem %s0, %s560
        %p562 = scmp.lt.s32.totalorder %s31, 1
        %s563 = scalar_select %p562, %s31, 1
        %s564 = smul.addr %s563, 2
        %s565 = smul.addr %s564, 8
        %s566 = scalar_lea.vmem %s1, %s565
        %v567 = vld [vmem:[%s561] sm:$0xff]
        %v568 = vld [vmem:[%s561 + $0x8] sm:$0xff]
        %v569 = vadd.f32 %v567, %v568
        %570 = vadd.xlane.f32.xlu0 %v569
        %v571 = vpop.xlane.xlu0 %570
        %v572 = vadd.f32 %v571, 0.0
        %v573 = vld [vmem:[%s566] sm:$0xff]
        %v574 = vld [vmem:[%s566 + $0x8] sm:$0xff]
        %v575 = vadd.f32 %v573, %v574
        %576 = vadd.xlane.f32.xlu0 %v575
        %v577 = vpop.xlane.xlu0 %576
        %v578 = vadd.f32 %v577, 0.0
        %v579 = vld [vmem:[%s4] sm:$0xff]
        %v580 = vld [vmem:[%s4 + $0x8] sm:$0xff]
        %582 = vset.pattern.permute.xlu0 0
        %583 = vperm.xlu0 %582, %v579
        %v584 = vpop.permute.xlu0 %583
        %587 = vset.pattern.permute.xlu0 0
        %588 = vperm.xlu0 %587, %v580
        %v589 = vpop.permute.xlu0 %588
        %v591 = vld [vmem:[%s2] sm:$0xff]
        %v592 = vld [vmem:[%s2 + $0x8] sm:$0xff]
        %v593 = vmul.f32 %v572, 0.00390625
        %vm594 = vcmask 64512
        %v596 = vsel %vm594, %v591, 0
        %v599 = vsel %vm594, %v592, 0
        %601 = vmatpush.msra.mxu0 0.0
        %602 = vmatpush.msra.mxu0 0.0
        %603 = vmatpush.msra.mxu0 0.0
        %604 = vmatpush.msra.mxu0 0.0
        %605 = vmatpush.msra.mxu0 0.0
        %606 = vmatpush.msra.mxu0 0.0
        %607 = vmatpush.msra.mxu0 0.0
        %608 = vmatpush.msra.mxu0 0.0
        %609 = vmatpush.msra.mxu0 0.0
        %610 = vmatpush.msra.mxu0 0.0
        %611 = vmatpush.msra.mxu0 0.0
        %612 = vmatpush.msra.mxu0 0.0
        %613 = vmatpush.msra.mxu0 0.0
        %614 = vmatpush.msra.mxu0 0.0
        %615 = vmatpush.msra.mxu0 0.0
        %616 = vmatpush.msra.mxu0 %v593
        %617 = vmatmul.f32.gmra.mxu0 %v596
        %v618 = vpop.f32.mrf.mxu0
        %v619 = vadd.f32 0.0, %v618
        %620 = vmatmul.f32.gmra.mxu0 %v599
        %v621 = vpop.f32.mrf.mxu0
        %v622 = vadd.f32 0.0, %v621
        %623 = vdwg.mxu0
        %v624 = vadd.f32 %v584, %v619
        %v625 = vadd.f32 %v589, %v622
        %v626 = vld [vmem:[%s3] sm:$0xff]
        %v627 = vld [vmem:[%s3 + $0x8] sm:$0xff]
        %v628 = vmul.f32 %v578, 0.00390625
        %v630 = vsel %vm594, %v626, 0
        %v633 = vsel %vm594, %v627, 0
        %635 = vmatpush.msra.mxu0 0.0
        %636 = vmatpush.msra.mxu0 0.0
        %637 = vmatpush.msra.mxu0 0.0
        %638 = vmatpush.msra.mxu0 0.0
        %639 = vmatpush.msra.mxu0 0.0
        %640 = vmatpush.msra.mxu0 0.0
        %641 = vmatpush.msra.mxu0 0.0
        %642 = vmatpush.msra.mxu0 0.0
        %643 = vmatpush.msra.mxu0 0.0
        %644 = vmatpush.msra.mxu0 0.0
        %645 = vmatpush.msra.mxu0 0.0
        %646 = vmatpush.msra.mxu0 0.0
        %647 = vmatpush.msra.mxu0 0.0
        %648 = vmatpush.msra.mxu0 0.0
        %649 = vmatpush.msra.mxu0 0.0
        %650 = vmatpush.msra.mxu0 %v628
        %651 = vmatmul.f32.gmra.mxu0 %v630
        %v652 = vpop.f32.mrf.mxu0
        %v653 = vadd.f32 0.0, %v652
        %654 = vmatmul.f32.gmra.mxu0 %v633
        %v655 = vpop.f32.mrf.mxu0
        %v656 = vadd.f32 0.0, %v655
        %657 = vdwg.mxu0
        %v658 = vadd.f32 %v624, %v653
        %v659 = vadd.f32 %v625, %v656
        %v660 = vmax.f32 %v658, 0.0
        %v661 = vmax.f32 %v659, 0.0
        %v662 = vld [vmem:[%s5] sm:$0xff]
        %v663 = vld [vmem:[%s6] sm:$0xff]
        %665 = vset.pattern.permute.xlu0 0
        %666 = vperm.xlu0 %665, %v663
        %v667 = vpop.permute.xlu0 %666
        %vm669 = vcmask 130048
        %v671 = vsel %vm669, %v662, 0
        %673 = vmatpush.msra.mxu0 0.0
        %674 = vmatpush.msra.mxu0 0.0
        %675 = vmatpush.msra.mxu0 0.0
        %676 = vmatpush.msra.mxu0 0.0
        %677 = vmatpush.msra.mxu0 0.0
        %678 = vmatpush.msra.mxu0 0.0
        %679 = vmatpush.msra.mxu0 0.0
        %680 = vmatpush.msra.mxu0 0.0
        %681 = vmatpush.msra.mxu0 0.0
        %682 = vmatpush.msra.mxu0 0.0
        %683 = vmatpush.msra.mxu0 0.0
        %684 = vmatpush.msra.mxu0 0.0
        %685 = vmatpush.msra.mxu0 0.0
        %686 = vmatpush.msra.mxu0 0.0
        %687 = vmatpush.msra.mxu0 %v661
        %688 = vmatpush.msra.mxu0 %v660
        %689 = vmatmul.f32.gmra.mxu0 %v671
        %v690 = vpop.f32.mrf.mxu0
        %v691 = vadd.f32 %v667, %v690
        %692 = vdwg.mxu0
        %v693 = vmax.f32 %v691, 0.0
        %v694 = vld [vmem:[%s7] sm:$0xff]
        %v695 = vld [vmem:[%s8] sm:$0xff]
        %697 = vset.pattern.permute.xlu0 0
        %698 = vperm.xlu0 %697, %v695
        %v699 = vpop.permute.xlu0 %698
        %v702 = vsel %vm594, %v694, 0
        %704 = vmatpush.msra.mxu0 0.0
        %705 = vmatpush.msra.mxu0 0.0
        %706 = vmatpush.msra.mxu0 0.0
        %707 = vmatpush.msra.mxu0 0.0
        %708 = vmatpush.msra.mxu0 0.0
        %709 = vmatpush.msra.mxu0 0.0
        %710 = vmatpush.msra.mxu0 0.0
        %711 = vmatpush.msra.mxu0 0.0
        %712 = vmatpush.msra.mxu0 0.0
        %713 = vmatpush.msra.mxu0 0.0
        %714 = vmatpush.msra.mxu0 0.0
        %715 = vmatpush.msra.mxu0 0.0
        %716 = vmatpush.msra.mxu0 0.0
        %717 = vmatpush.msra.mxu0 0.0
        %718 = vmatpush.msra.mxu0 0.0
        %719 = vmatpush.msra.mxu0 %v693
        %720 = vmatmul.f32.gmra.mxu0 %v702
        %v721 = vpop.f32.mrf.mxu0
        %v722 = vadd.f32 %v699, %v721
        %723 = vdwg.mxu0
        %v724 = vmax.f32 %v722, 0.0
        %v725 = vld [vmem:[%s9] sm:$0xff]
        %v726 = vld [vmem:[%s10] sm:$0xff]
        %728 = vset.pattern.permute.xlu0 0
        %729 = vperm.xlu0 %728, %v726
        %v730 = vpop.permute.xlu0 %729
        %v733 = vsel %vm594, %v725, 0
        %735 = vmatpush.msra.mxu0 0.0
        %736 = vmatpush.msra.mxu0 0.0
        %737 = vmatpush.msra.mxu0 0.0
        %738 = vmatpush.msra.mxu0 0.0
        %739 = vmatpush.msra.mxu0 0.0
        %740 = vmatpush.msra.mxu0 0.0
        %741 = vmatpush.msra.mxu0 0.0
        %742 = vmatpush.msra.mxu0 0.0
        %743 = vmatpush.msra.mxu0 0.0
        %744 = vmatpush.msra.mxu0 0.0
        %745 = vmatpush.msra.mxu0 0.0
        %746 = vmatpush.msra.mxu0 0.0
        %747 = vmatpush.msra.mxu0 0.0
        %748 = vmatpush.msra.mxu0 0.0
        %749 = vmatpush.msra.mxu0 0.0
        %750 = vmatpush.msra.mxu0 %v724
        %751 = vmatmul.f32.gmra.mxu0 %v733
        %v752 = vpop.f32.mrf.mxu0
        %v753 = vadd.f32 %v730, %v752
        %754 = vdwg.mxu0
        %v755 = vmax.f32 %v753, 0.0
        %v756 = vld [vmem:[%s11] sm:$0xff]
        %v757 = vld [vmem:[%s11 + $0x8] sm:$0xff]
        %v758 = vld [vmem:[%s12] sm:$0xff]
        %v759 = vld [vmem:[%s12 + $0x8] sm:$0xff]
        %761 = vset.pattern.permute.xlu0 0
        %762 = vperm.xlu0 %761, %v758
        %v763 = vpop.permute.xlu0 %762
        %766 = vset.pattern.permute.xlu0 0
        %767 = vperm.xlu0 %766, %v759
        %v768 = vpop.permute.xlu0 %767
        %v771 = vsel %vm594, %v756, 0
        %v774 = vsel %vm594, %v757, 0
        %776 = vmatpush.msra.mxu0 0.0
        %777 = vmatpush.msra.mxu0 0.0
        %778 = vmatpush.msra.mxu0 0.0
        %779 = vmatpush.msra.mxu0 0.0
        %780 = vmatpush.msra.mxu0 0.0
        %781 = vmatpush.msra.mxu0 0.0
        %782 = vmatpush.msra.mxu0 0.0
        %783 = vmatpush.msra.mxu0 0.0
        %784 = vmatpush.msra.mxu0 0.0
        %785 = vmatpush.msra.mxu0 0.0
        %786 = vmatpush.msra.mxu0 0.0
        %787 = vmatpush.msra.mxu0 0.0
        %788 = vmatpush.msra.mxu0 0.0
        %789 = vmatpush.msra.mxu0 0.0
        %790 = vmatpush.msra.mxu0 0.0
        %791 = vmatpush.msra.mxu0 %v755
        %792 = vmatmul.f32.gmra.mxu0 %v771
        %v793 = vpop.f32.mrf.mxu0
        %v794 = vadd.f32 %v763, %v793
        %795 = vmatmul.f32.gmra.mxu0 %v774
        %v796 = vpop.f32.mrf.mxu0
        %v797 = vadd.f32 %v768, %v796
        %798 = vdwg.mxu0
        %v799 = vmax.f32 %v794, 0.0
        %v800 = vmax.f32 %v797, 0.0
        %v801 = vld [vmem:[%s13] sm:$0xff]
        %v802 = vld [vmem:[%s15] sm:$0xff]
        %804 = vset.pattern.permute.xlu0 0
        %805 = vperm.xlu0 %804, %v802
        %v806 = vpop.permute.xlu0 %805
        %v809 = vsel %vm669, %v801, 0
        %811 = vmatpush.msra.mxu0 0.0
        %812 = vmatpush.msra.mxu0 0.0
        %813 = vmatpush.msra.mxu0 0.0
        %814 = vmatpush.msra.mxu0 0.0
        %815 = vmatpush.msra.mxu0 0.0
        %816 = vmatpush.msra.mxu0 0.0
        %817 = vmatpush.msra.mxu0 0.0
        %818 = vmatpush.msra.mxu0 0.0
        %819 = vmatpush.msra.mxu0 0.0
        %820 = vmatpush.msra.mxu0 0.0
        %821 = vmatpush.msra.mxu0 0.0
        %822 = vmatpush.msra.mxu0 0.0
        %823 = vmatpush.msra.mxu0 0.0
        %824 = vmatpush.msra.mxu0 0.0
        %825 = vmatpush.msra.mxu0 %v800
        %826 = vmatpush.msra.mxu0 %v799
        %827 = vmatmul.f32.gmra.mxu0 %v809
        %v828 = vpop.f32.mrf.mxu0
        %v829 = vadd.f32 %v806, %v828
        %830 = vdwg.mxu0
        %v831 = vld [vmem:[%s14] sm:$0xff]
        %v832 = vld [vmem:[%s16] sm:$0xff]
        %834 = vset.pattern.permute.xlu0 0
        %835 = vperm.xlu0 %834, %v832
        %v836 = vpop.permute.xlu0 %835
        %v839 = vsel %vm669, %v831, 0
        %841 = vmatpush.msra.mxu0 0.0
        %842 = vmatpush.msra.mxu0 0.0
        %843 = vmatpush.msra.mxu0 0.0
        %844 = vmatpush.msra.mxu0 0.0
        %845 = vmatpush.msra.mxu0 0.0
        %846 = vmatpush.msra.mxu0 0.0
        %847 = vmatpush.msra.mxu0 0.0
        %848 = vmatpush.msra.mxu0 0.0
        %849 = vmatpush.msra.mxu0 0.0
        %850 = vmatpush.msra.mxu0 0.0
        %851 = vmatpush.msra.mxu0 0.0
        %852 = vmatpush.msra.mxu0 0.0
        %853 = vmatpush.msra.mxu0 0.0
        %854 = vmatpush.msra.mxu0 0.0
        %855 = vmatpush.msra.mxu0 %v800
        %856 = vmatpush.msra.mxu0 %v799
        %857 = vmatmul.f32.gmra.mxu0 %v839
        %v858 = vpop.f32.mrf.mxu0
        %v859 = vadd.f32 %v836, %v858
        %860 = vdwg.mxu0
        %v861 = vmax.f32 %v829, %v859
        %v862 = vsub.f32 %v829, %v861
        %v863 = vmul.f32 %v862, 1.442695
        %v864 = vpow.pop %v863
        %v865 = vsub.f32 %v859, %v861
        %v866 = vmul.f32 %v865, 1.442695
        %v867 = vpow.pop %v866
        %v868 = vadd.f32 %v864, %v867
        %v869 = vrcp.pop %v868
        %v870 = vmul.f32 %v868, %v869
        %v871 = vsub.f32 1.0, %v870
        %v872 = vmul.f32 %v869, %v871
        %v873 = vadd.f32 %v869, %v872
        %vm874 = vweird.f32 %v868
        %vm875 = vweird.f32 %v869
        %vm876 = vmor %vm874, %vm875
        %v877 = vsel %vm876, %v869, %v873
        %v878 = vand.u32 2147483647, %v868
        %vm879 = vcmp.eq.f32.partialorder %v878, 8.507059e+37
        %v880 = vand.u32 %v868, 2147483648
        %v881 = vor.u32 1.1754944e-38, %v880
        %v882 = vsel %vm879, %v881, %v877
        %v883 = vmul.f32 %v864, %v882
        %v884 = vmul.f32 %v867, %v882
        %886 = vset.pattern.permute.xlu0 0
        %887 = vperm.xlu0 %886, %v883
        %v888 = vpop.permute.xlu0 %887
        %v890 = vmul.f32 %v888, %v567
        %v891 = vmul.f32 %v888, %v568
        %893 = vset.pattern.permute.xlu0 0
        %894 = vperm.xlu0 %893, %v884
        %v895 = vpop.permute.xlu0 %894
        %v897 = vmul.f32 %v895, %v573
        %v898 = vmul.f32 %v895, %v574
        %v899 = vadd.f32 %v890, %v897
        %v900 = vadd.f32 %v891, %v898
        %901 = vst [vmem:[%s556] sm:$0xff] %v899
        %902 = vst [vmem:[%s556 + $0x8] sm:$0xff] %v900
        %s903 = sand.u32 %s406, 1
        %s904 = scalar_lea.sflag [#allocation3], %s903
        %s905 = sand.u32 %s406, 1
        %s906 = smul.addr %s905, 16
        %s907 = scalar_lea.vmem [#allocation2], %s906
        // Predicated region
        $region89: #{tpu_custom_call.1} parent=87 // pred_check
          %p908 = pneg %p416
        $region90: #{tpu_custom_call.1} parent=87 // pred_check_branch
          %910 = sbr.rel (%p908) target = $region92
        $region91: #{tpu_custom_call.1} parent=87 // pred_region
          %912 = vsyncadd %s904, 0
          %s913 = smul.addr %s31, 2
          %s914 = smul.addr %s913, 8
          %s915 = scalar_lea.hbm %s17, %s914
          %s917 = sshll.u32 %s907, 4
          %s918 = int_to_ptr.vmem [resolvable:$true] %s917
          %s919 = sshll.u32 %s915, 4
          %s920 = int_to_ptr.hbm [resolvable:$true] %s919
          %922 = dma.vmem_to_hbm [thread:$0]  %s918, 256, %s920, %s904
        $region92: #{tpu_custom_call.1} parent=87 // pred_fallthru
          _
      $region88: #{tpu_custom_call.1} parent=5 // pred_fallthru
        _
      %p923 = scmp.le.s32.totalorder 2, %s26
      // Predicated region
      $region93: #{tpu_custom_call.1} parent=5 // pred_check
        %p924 = pneg %p923
      $region94: #{tpu_custom_call.1} parent=5 // pred_check_branch
        %926 = sbr.rel (%p924) target = $region96
      $region95: #{tpu_custom_call.1} parent=5 // pred_region
        %s927 = ssub.s32 %s26, 2
        // Predicated region
        $region97: #{tpu_custom_call.1} parent=95 // pred_check
          %p928 = pneg %p422
        $region98: #{tpu_custom_call.1} parent=95 // pred_check_branch
          %930 = sbr.rel (%p928) target = $region100
        $region99: #{tpu_custom_call.1} parent=95 // pred_region
          %s931 = sand.u32 %s407, 1
          %s932 = scalar_lea.sflag [#allocation3], %s931
          %s933 = sand.u32 %s407, 1
          %s934 = smul.addr %s933, 16
          %s935 = scalar_lea.vmem [#allocation2], %s934
          %937 = dma.done %s932, 256
        $region100: #{tpu_custom_call.1} parent=95 // pred_fallthru
          _
      $region96: #{tpu_custom_call.1} parent=5 // pred_fallthru
        _
    $region6: #{tpu_custom_call.1} parent=1 // loop_footer
      %s30 = sadd.s32 1, %s26
    $region7: #{tpu_custom_call.1} parent=1 // loop_footer_branch
      %25 = sbr.rel target = $region3
    $region8: #{tpu_custom_call.1} parent=1 // loop_exit
      _
    %938 = vsyncpa [#allocation3], 1
    %s939 = scalar_lea.sflag [#allocation3], 1
    %940 = vsyncpa %s939, 1

</llo_original>
